<compile_context>
chip_gen: v5e
topology: v5e:2x2
jax: 0.10.0
libtpu: 0.0.40
codegen_flags: <defaults>
</compile_context>

<pallas_src>
import jax
import jax.numpy as jnp
from jax.experimental import pallas as pl
from jax.experimental.pallas import tpu as pltpu


def _round_up(x, m):
    return ((x + m - 1) // m) * m


def _cdiv(a, b):
    return -(-a // b)


def _choose_batch_tile(B, cap=2048):
    """Batch tile (lane dim) and padded batch size.

    B <= cap  -> one tile covering everything (no per-step overhead; best on 1-TC chips).
    B  > cap  -> an even number of tiles (so v7x megacore 'parallel' keeps both TCs busy),
                 each a multiple of 128 lanes and <= cap.
    """
    Bp = _round_up(max(B, 1), 128)
    if Bp <= cap:
        return Bp, Bp
    n_tiles = _round_up(_cdiv(Bp, cap), 2)
    TB = _round_up(_cdiv(Bp, n_tiles), 128)
    return TB, TB * n_tiles


def critic_kernel(xT_ref, w1_ref, w2_ref, w3_ref, out_ref):
    # xT_ref : [Dp, TB]   bf16  feature-major input; row D is the constant-1 bias channel
    # w1_ref : [H1p, Dp]  bf16  fc1.weight (already transposed) with b1 folded into col D,
    #                           and row H1 = ones-channel passthrough
    # w2_ref : [H2p, H1p] bf16  fc2.weight^T with b2 folded into col H1, row H2 = passthrough
    # w3_ref : [1, H2p]   bf16  fc3.weight^T with b3 folded into col H2
    # out_ref: [1, TB]    f32   lane-dense q slab
    h1 = jnp.dot(w1_ref[...], xT_ref[...], preferred_element_type=jnp.float32)
    h1 = jnp.maximum(h1, 0.0).astype(jnp.bfloat16)          # relu(1)=1 keeps bias channel alive
    h2 = jnp.dot(w2_ref[...], h1, preferred_element_type=jnp.float32)
    h2 = jnp.maximum(h2, 0.0).astype(jnp.bfloat16)
    out_ref[...] = jnp.dot(w3_ref[...], h2, preferred_element_type=jnp.float32)


def prepare_critic_params(w1, b1, w2, b2, w3, b3):
    """One-time prep: feature-major, zero-padded, bias-folded, bf16 weights."""
    D, H1 = w1.shape
    H2 = w2.shape[1]
    Dp = _round_up(D + 1, 8)          # +1 = constant-1 bias channel
    H1p = _round_up(H1 + 1, 128)      # 400(+1) -> 512
    H2p = _round_up(H2 + 1, 128)      # 300(+1) -> 384

    w1f = jnp.zeros((H1p, Dp), jnp.float32)
    w1f = w1f.at[:H1, :D].set(jnp.asarray(w1, jnp.float32).T)
    w1f = w1f.at[:H1, D].set(jnp.asarray(b1, jnp.float32))
    w1f = w1f.at[H1, D].set(1.0)                      # pass the ones channel to layer 2

    w2f = jnp.zeros((H2p, H1p), jnp.float32)
    w2f = w2f.at[:H2, :H1].set(jnp.asarray(w2, jnp.float32).T)
    w2f = w2f.at[:H2, H1].set(jnp.asarray(b2, jnp.float32))
    w2f = w2f.at[H2, H1].set(1.0)                     # pass the ones channel to layer 3

    w3f = jnp.zeros((1, H2p), jnp.float32)
    w3f = w3f.at[0, :H2].set(jnp.asarray(w3, jnp.float32)[:, 0])
    w3f = w3f.at[0, H2].set(jnp.asarray(b3, jnp.float32).reshape(()))

    return (w1f.astype(jnp.bfloat16),
            w2f.astype(jnp.bfloat16),
            w3f.astype(jnp.bfloat16))


@jax.jit
def critic_forward(state, action, w1f, w2f, w3f):
    """q = fc3(relu(fc2(relu(fc1(cat([state, action], 1)))))) -> [B, 1] (f32)."""
    B = state.shape[0]
    D = state.shape[1] + action.shape[1]
    Dp = w1f.shape[1]
    H1p = w1f.shape[0]
    H2p = w2f.shape[0]
    TB, Bp = _choose_batch_tile(B)

    # Feature-major input slab with the constant-1 bias channel at row D.
    # One fused concat+pad pass; transpose is fused into the concat (D is tiny).
    xT = jnp.concatenate(
        [state.T.astype(jnp.bfloat16),
         action.T.astype(jnp.bfloat16),
         jnp.ones((1, B), jnp.bfloat16)], axis=0)                 # [D+1, B]
    xT = jnp.pad(xT, ((0, Dp - (D + 1)), (0, Bp - B)))            # [Dp, Bp]

    out = pl.pallas_call(
        critic_kernel,
        out_shape=jax.ShapeDtypeStruct((1, Bp), jnp.float32),
        grid=(Bp // TB,),
        in_specs=[
            pl.BlockSpec((Dp, TB), lambda i: (0, i)),      # x: streamed over batch tiles
            pl.BlockSpec((H1p, Dp), lambda i: (0, 0)),     # weights: resident (constant index)
            pl.BlockSpec((H2p, H1p), lambda i: (0, 0)),
            pl.BlockSpec((1, H2p), lambda i: (0, 0)),
        ],
        out_specs=pl.BlockSpec((1, TB), lambda i: (0, i)),  # lane-dense output slab
        compiler_params=pltpu.CompilerParams(
            dimension_semantics=("parallel",),              # shard batch tiles across TCs on v7x
            vmem_limit_bytes=48 * 1024 * 1024,              # room for TB up to 2048 even on v5e
        ),
    )(xT, w1f, w2f, w3f)

    return out[0, :B].reshape(B, 1)


def init_params(key, state_dim, action_dim, h1=400, h2=300):
    # Deterministic init mimicking PyTorch nn.Linear: U(-1/sqrt(fan_in), 1/sqrt(fan_in)).
    k = jax.random.split(key, 6)
    d_in = state_dim + action_dim

    def lin(kw, kb, fan_in, fan_out):
        bound = 1.0 / jnp.sqrt(float(fan_in))
        w = jax.random.uniform(kw, (fan_in, fan_out), jnp.float32, -bound, bound)
        b = jax.random.uniform(kb, (fan_out,), jnp.float32, -bound, bound)
        return w, b

    w1, b1 = lin(k[0], k[1], d_in, h1)
    w2, b2 = lin(k[2], k[3], h1, h2)
    w3, b3 = lin(k[4], k[5], h2, 1)
    return w1, b1, w2, b2, w3, b3


if __name__ == "__main__":
    key = jax.random.PRNGKey(0)
    ks, ka, kp = jax.random.split(key, 3)
    B, state_dim, action_dim = 8, 3, 1

    state = jax.random.normal(ks, (B, state_dim), jnp.float32)
    action = jax.random.normal(ka, (B, action_dim), jnp.float32)
    w1, b1, w2, b2, w3, b3 = init_params(kp, state_dim, action_dim)

    # One-time padded/folded bf16 weights (hoisted out of the forward pass).
    w1f, w2f, w3f = prepare_critic_params(w1, b1, w2, b2, w3, b3)

    out = critic_forward(state, action, w1f, w2f, w3f)
    jax.block_until_ready(out)
    assert out.shape == (B, 1)

    # Reference 1: emulate the kernel's bf16-operand / f32-accumulate dataflow (tight check).
    def bf(x):
        return x.astype(jnp.bfloat16).astype(jnp.float32)
    xb = jnp.concatenate([state, action], axis=1)
    r = jnp.maximum(bf(xb) @ bf(w1) + bf(b1), 0.0)
    r = jnp.maximum(bf(r) @ bf(w2) + bf(b2), 0.0)
    ref_bf16 = bf(r) @ bf(w3) + bf(b3)
    assert jnp.allclose(out, ref_bf16, atol=1e-3, rtol=1e-3), "mismatch vs bf16-emulating reference"

    # Reference 2: pure f32 math of the PyTorch module (loose sanity check; bf16 inputs).
    ref = jnp.maximum(xb @ w1 + b1, 0.0)
    ref = jnp.maximum(ref @ w2 + b2, 0.0)
    ref = ref @ w3 + b3
    assert jnp.allclose(out, ref, atol=5e-2, rtol=5e-2), "mismatch vs f32 reference"

    print("KERNEL_OK")
</pallas_src>

<mosaic_0001>
module attributes {stable_mosaic.version = 11 : i64} {
  func.func @critic_kernel(%arg0: i32, %arg1: memref<8x128xbf16, #tpu.memory_space<vmem>>, %arg2: memref<512x8xbf16, #tpu.memory_space<vmem>>, %arg3: memref<384x512xbf16, #tpu.memory_space<vmem>>, %arg4: memref<1x384xbf16, #tpu.memory_space<vmem>>, %arg5: memref<1x128xf32, #tpu.memory_space<vmem>>) attributes {dimension_semantics = [#tpu.dimension_semantics<parallel>], iteration_bounds = array<i64: 1>, scalar_prefetch = 0 : i64, scratch_operands = 0 : i64, tpu.core_type = #tpu.core_type<tc>, window_params = [{transform_indices = @transform_0, window_bounds = array<i64: 8, 128>}, {pipeline_mode = #tpu.pipeline_mode<synchronous>, transform_indices = @transform_1, window_bounds = array<i64: 512, 8>}, {pipeline_mode = #tpu.pipeline_mode<synchronous>, transform_indices = @transform_2, window_bounds = array<i64: 384, 512>}, {pipeline_mode = #tpu.pipeline_mode<synchronous>, transform_indices = @transform_3, window_bounds = array<i64: 1, 384>}, {transform_indices = @transform_4, window_bounds = array<i64: 1, 128>}]} {
    %c0 = arith.constant 0 : index
    %c0_0 = arith.constant 0 : index
    %0 = vector.load %arg2[%c0, %c0_0] : memref<512x8xbf16, #tpu.memory_space<vmem>>, vector<512x8xbf16>
    %c0_1 = arith.constant 0 : index
    %c0_2 = arith.constant 0 : index
    %1 = vector.load %arg1[%c0_1, %c0_2] : memref<8x128xbf16, #tpu.memory_space<vmem>>, vector<8x128xbf16>
    %cst = arith.constant dense<0.000000e+00> : vector<512x128xf32>
    %2 = tpu.matmul %0, %1, %cst {dimension_numbers = #tpu.dot_dimension_numbers<[1], [0], [0], [1], [0, 0, 1, 1], [], []>} : vector<512x8xbf16>, vector<8x128xbf16>, vector<512x128xf32> -> vector<512x128xf32>
    %cst_3 = arith.constant 0.000000e+00 : f32
    %3 = vector.broadcast %cst_3 : f32 to vector<512x128xf32>
    %4 = arith.maximumf %2, %3 : vector<512x128xf32>
    %5 = arith.truncf %4 : vector<512x128xf32> to vector<512x128xbf16>
    %c0_4 = arith.constant 0 : index
    %c0_5 = arith.constant 0 : index
    %6 = vector.load %arg3[%c0_4, %c0_5] : memref<384x512xbf16, #tpu.memory_space<vmem>>, vector<384x512xbf16>
    %cst_6 = arith.constant dense<0.000000e+00> : vector<384x128xf32>
    %7 = tpu.matmul %6, %5, %cst_6 {dimension_numbers = #tpu.dot_dimension_numbers<[1], [0], [0], [1], [0, 0, 1, 1], [], []>} : vector<384x512xbf16>, vector<512x128xbf16>, vector<384x128xf32> -> vector<384x128xf32>
    %cst_7 = arith.constant 0.000000e+00 : f32
    %8 = vector.broadcast %cst_7 : f32 to vector<384x128xf32>
    %9 = arith.maximumf %7, %8 : vector<384x128xf32>
    %10 = arith.truncf %9 : vector<384x128xf32> to vector<384x128xbf16>
    %c0_8 = arith.constant 0 : index
    %c0_9 = arith.constant 0 : index
    %11 = vector.load %arg4[%c0_8, %c0_9] : memref<1x384xbf16, #tpu.memory_space<vmem>>, vector<1x384xbf16>
    %cst_10 = arith.constant dense<0.000000e+00> : vector<1x128xf32>
    %12 = tpu.matmul %11, %10, %cst_10 {dimension_numbers = #tpu.dot_dimension_numbers<[1], [0], [0], [1], [0, 0, 1, 1], [], []>} : vector<1x384xbf16>, vector<384x128xbf16>, vector<1x128xf32> -> vector<1x128xf32>
    %c0_11 = arith.constant 0 : index
    %c0_12 = arith.constant 0 : index
    %13 = vector.load %arg5[%c0_11, %c0_12] : memref<1x128xf32, #tpu.memory_space<vmem>>, vector<1x128xf32>
    tpu.vector_store %arg5[%c0_11, %c0_12], %12 {strides = array<i32>} : memref<1x128xf32, #tpu.memory_space<vmem>>, vector<1x128xf32>,
    return
  }
  func.func @transform_0(%arg0: i32) -> (i32, i32) {
    %c0_i32 = arith.constant 0 : i32
    %c0_i32_0 = arith.constant 0 : i32
    return %c0_i32, %arg0 : i32, i32
  }
  func.func @transform_1(%arg0: i32) -> (i32, i32) {
    %c0_i32 = arith.constant 0 : i32
    %c0_i32_0 = arith.constant 0 : i32
    %c0_i32_1 = arith.constant 0 : i32
    return %c0_i32, %c0_i32_0 : i32, i32
  }
  func.func @transform_2(%arg0: i32) -> (i32, i32) {
    %c0_i32 = arith.constant 0 : i32
    %c0_i32_0 = arith.constant 0 : i32
    %c0_i32_1 = arith.constant 0 : i32
    return %c0_i32, %c0_i32_0 : i32, i32
  }
  func.func @transform_3(%arg0: i32) -> (i32, i32) {
    %c0_i32 = arith.constant 0 : i32
    %c0_i32_0 = arith.constant 0 : i32
    %c0_i32_1 = arith.constant 0 : i32
    return %c0_i32, %c0_i32_0 : i32, i32
  }
  func.func @transform_4(%arg0: i32) -> (i32, i32) {
    %c0_i32 = arith.constant 0 : i32
    %c0_i32_0 = arith.constant 0 : i32
    return %c0_i32, %arg0 : i32, i32
  }
}

</mosaic_0001>

<llo_original>
// kernel: critic_forward.1
$region0: #{critic_forward.1}
  #allocation0 [shape = 'u32[]', space=smem, size = 0x4, offset = 0x4, fixed_abs, tag = 'smem constant byte address 0x4 - core index']
  #allocation1 [shape = 'u32[72,128]{1,0:T(1,128)}', space=vmem, size = 0x9000, scoped, tag = 'internal scratch']
  %s0 = inlined_call_operand.vmem [shape: bf16[8,128], index: 0, kind: input, shape index: {}]
  %s1 = inlined_call_operand.vmem [shape: bf16[512,8], index: 1, kind: input, shape index: {}]
  %s2 = inlined_call_operand.hbm [shape: bf16[384,512], index: 2, kind: input, shape index: {}]
  %s3 = inlined_call_operand.vmem [shape: bf16[1,384], index: 3, kind: input, shape index: {}]
  %s4 = inlined_call_operand.vmem [shape: f32[1,128], index: 4, kind: output, shape index: {}]
  %s5 = sld [smem:[#allocation0]]
  $region30: #{critic_forward.1} parent=0
    _
  %s7 = ssub.s32 1, %s5
  %s8 = scalar_select 0, %s7, %s5
  $region1: #{critic_forward.1} parent=0
    #allocation2 [shape = 'u8[393216]{0}', space=vmem, size = 0x60000, scoped, tag = 'input window, operand 2, single buffered']
    #allocation3 [shape = 's32[1]{0}', space=sflag, size = 0x4, scoped, tag = 'scoped memory for critic_forward.1']
    %9 = vsyncpa [#allocation3], 0
    // Predicated region
    $region2: #{critic_forward.1} parent=1 // pred_check
      _
    $region3: #{critic_forward.1} parent=1 // pred_check_branch
      %11 = sbr.rel (0) target = $region5
    $region4: #{critic_forward.1} parent=1 // pred_region
      _
    $region5: #{critic_forward.1} parent=1 // pred_fallthru
      _
    // Predicated region
    $region6: #{critic_forward.1} parent=1 // pred_check
      _
    $region7: #{critic_forward.1} parent=1 // pred_check_branch
      %13 = sbr.rel (0) target = $region9
    $region8: #{critic_forward.1} parent=1 // pred_region
      _
    $region9: #{critic_forward.1} parent=1 // pred_fallthru
      _
    // Predicated region
    $region10: #{critic_forward.1} parent=1 // pred_check
      _
    $region11: #{critic_forward.1} parent=1 // pred_check_branch
      %15 = sbr.rel (0) target = $region13
    $region12: #{critic_forward.1} parent=1 // pred_region
      %17 = vsyncadd [#allocation3], 0
      %s18 = sshll.u32 %s2, 4
      %s19 = int_to_ptr.hbm [resolvable:$true] %s18
      %s20 = sshll.u32 [#allocation2], 4
      %s21 = int_to_ptr.vmem [resolvable:$true] %s20
      %26 = dma.hbm_to_vmem [thread:$0]  %s19, 12288, %s21, [#allocation3], 256, 256, 16
    $region13: #{critic_forward.1} parent=1 // pred_fallthru
      _
    // Predicated region
    $region14: #{critic_forward.1} parent=1 // pred_check
      _
    $region15: #{critic_forward.1} parent=1 // pred_check_branch
      %28 = sbr.rel (0) target = $region17
    $region16: #{critic_forward.1} parent=1 // pred_region
      _
    $region17: #{critic_forward.1} parent=1 // pred_fallthru
      _
    // Predicated region
    $region18: #{critic_forward.1} parent=1 // pred_check
      _
    $region19: #{critic_forward.1} parent=1 // pred_check_branch
      %30 = sbr.rel (0) target = $region21
    $region20: #{critic_forward.1} parent=1 // pred_region
      %32 = dma.done [#allocation3], 12288
    $region21: #{critic_forward.1} parent=1 // pred_fallthru
      _
    %v34 = vld [vmem:[%s1] sm:$0xf]
    %v35 = vld [vmem:[%s1 + $0x4] sm:$0xf]
    %v36 = vld [vmem:[%s1 + $0x8] sm:$0xf]
    %v37 = vld [vmem:[%s1 + $0xc] sm:$0xf]
    %v38 = vld [vmem:[%s1 + $0x10] sm:$0xf]
    %v39 = vld [vmem:[%s1 + $0x14] sm:$0xf]
    %v40 = vld [vmem:[%s1 + $0x18] sm:$0xf]
    %v41 = vld [vmem:[%s1 + $0x1c] sm:$0xf]
    %v42 = vld [vmem:[%s1 + $0x20] sm:$0xf]
    %v43 = vld [vmem:[%s1 + $0x24] sm:$0xf]
    %v44 = vld [vmem:[%s1 + $0x28] sm:$0xf]
    %v45 = vld [vmem:[%s1 + $0x2c] sm:$0xf]
    %v46 = vld [vmem:[%s1 + $0x30] sm:$0xf]
    %v47 = vld [vmem:[%s1 + $0x34] sm:$0xf]
    %v48 = vld [vmem:[%s1 + $0x38] sm:$0xf]
    %v49 = vld [vmem:[%s1 + $0x3c] sm:$0xf]
    %v50 = vld [vmem:[%s1 + $0x40] sm:$0xf]
    %v51 = vld [vmem:[%s1 + $0x44] sm:$0xf]
    %v52 = vld [vmem:[%s1 + $0x48] sm:$0xf]
    %v53 = vld [vmem:[%s1 + $0x4c] sm:$0xf]
    %v54 = vld [vmem:[%s1 + $0x50] sm:$0xf]
    %v55 = vld [vmem:[%s1 + $0x54] sm:$0xf]
    %v56 = vld [vmem:[%s1 + $0x58] sm:$0xf]
    %v57 = vld [vmem:[%s1 + $0x5c] sm:$0xf]
    %v58 = vld [vmem:[%s1 + $0x60] sm:$0xf]
    %v59 = vld [vmem:[%s1 + $0x64] sm:$0xf]
    %v60 = vld [vmem:[%s1 + $0x68] sm:$0xf]
    %v61 = vld [vmem:[%s1 + $0x6c] sm:$0xf]
    %v62 = vld [vmem:[%s1 + $0x70] sm:$0xf]
    %v63 = vld [vmem:[%s1 + $0x74] sm:$0xf]
    %v64 = vld [vmem:[%s1 + $0x78] sm:$0xf]
    %v65 = vld [vmem:[%s1 + $0x7c] sm:$0xf]
    %v66 = vld [vmem:[%s1 + $0x80] sm:$0xf]
    %v67 = vld [vmem:[%s1 + $0x84] sm:$0xf]
    %v68 = vld [vmem:[%s1 + $0x88] sm:$0xf]
    %v69 = vld [vmem:[%s1 + $0x8c] sm:$0xf]
    %v70 = vld [vmem:[%s1 + $0x90] sm:$0xf]
    %v71 = vld [vmem:[%s1 + $0x94] sm:$0xf]
    %v72 = vld [vmem:[%s1 + $0x98] sm:$0xf]
    %v73 = vld [vmem:[%s1 + $0x9c] sm:$0xf]
    %v74 = vld [vmem:[%s1 + $0xa0] sm:$0xf]
    %v75 = vld [vmem:[%s1 + $0xa4] sm:$0xf]
    %v76 = vld [vmem:[%s1 + $0xa8] sm:$0xf]
    %v77 = vld [vmem:[%s1 + $0xac] sm:$0xf]
    %v78 = vld [vmem:[%s1 + $0xb0] sm:$0xf]
    %v79 = vld [vmem:[%s1 + $0xb4] sm:$0xf]
    %v80 = vld [vmem:[%s1 + $0xb8] sm:$0xf]
    %v81 = vld [vmem:[%s1 + $0xbc] sm:$0xf]
    %v82 = vld [vmem:[%s1 + $0xc0] sm:$0xf]
    %v83 = vld [vmem:[%s1 + $0xc4] sm:$0xf]
    %v84 = vld [vmem:[%s1 + $0xc8] sm:$0xf]
    %v85 = vld [vmem:[%s1 + $0xcc] sm:$0xf]
    %v86 = vld [vmem:[%s1 + $0xd0] sm:$0xf]
    %v87 = vld [vmem:[%s1 + $0xd4] sm:$0xf]
    %v88 = vld [vmem:[%s1 + $0xd8] sm:$0xf]
    %v89 = vld [vmem:[%s1 + $0xdc] sm:$0xf]
    %v90 = vld [vmem:[%s1 + $0xe0] sm:$0xf]
    %v91 = vld [vmem:[%s1 + $0xe4] sm:$0xf]
    %v92 = vld [vmem:[%s1 + $0xe8] sm:$0xf]
    %v93 = vld [vmem:[%s1 + $0xec] sm:$0xf]
    %v94 = vld [vmem:[%s1 + $0xf0] sm:$0xf]
    %v95 = vld [vmem:[%s1 + $0xf4] sm:$0xf]
    %v96 = vld [vmem:[%s1 + $0xf8] sm:$0xf]
    %v97 = vld [vmem:[%s1 + $0xfc] sm:$0xf]
    %v98 = vld [vmem:[%s0] sm:$0xf]
    %v163 = vunpack.c.l.b16 %v34
    %v164 = vunpack.c.l.b16 %v35
    %v165 = vunpack.c.l.b16 %v36
    %v166 = vunpack.c.l.b16 %v37
    %v167 = vunpack.c.l.b16 %v38
    %v168 = vunpack.c.l.b16 %v39
    %v169 = vunpack.c.l.b16 %v40
    %v170 = vunpack.c.l.b16 %v41
    %v171 = vunpack.c.l.b16 %v42
    %v172 = vunpack.c.l.b16 %v43
    %v173 = vunpack.c.l.b16 %v44
    %v174 = vunpack.c.l.b16 %v45
    %v175 = vunpack.c.l.b16 %v46
    %v176 = vunpack.c.l.b16 %v47
    %v177 = vunpack.c.l.b16 %v48
    %v178 = vunpack.c.l.b16 %v49
    %v179 = vunpack.c.l.b16 %v50
    %v180 = vunpack.c.l.b16 %v51
    %v181 = vunpack.c.l.b16 %v52
    %v182 = vunpack.c.l.b16 %v53
    %v183 = vunpack.c.l.b16 %v54
    %v184 = vunpack.c.l.b16 %v55
    %v185 = vunpack.c.l.b16 %v56
    %v186 = vunpack.c.l.b16 %v57
    %v187 = vunpack.c.l.b16 %v58
    %v188 = vunpack.c.l.b16 %v59
    %v189 = vunpack.c.l.b16 %v60
    %v190 = vunpack.c.l.b16 %v61
    %v191 = vunpack.c.l.b16 %v62
    %v192 = vunpack.c.l.b16 %v63
    %v193 = vunpack.c.l.b16 %v64
    %v194 = vunpack.c.l.b16 %v65
    %v195 = vunpack.c.l.b16 %v66
    %v196 = vunpack.c.l.b16 %v67
    %v197 = vunpack.c.l.b16 %v68
    %v198 = vunpack.c.l.b16 %v69
    %v199 = vunpack.c.l.b16 %v70
    %v200 = vunpack.c.l.b16 %v71
    %v201 = vunpack.c.l.b16 %v72
    %v202 = vunpack.c.l.b16 %v73
    %v203 = vunpack.c.l.b16 %v74
    %v204 = vunpack.c.l.b16 %v75
    %v205 = vunpack.c.l.b16 %v76
    %v206 = vunpack.c.l.b16 %v77
    %v207 = vunpack.c.l.b16 %v78
    %v208 = vunpack.c.l.b16 %v79
    %v209 = vunpack.c.l.b16 %v80
    %v210 = vunpack.c.l.b16 %v81
    %v211 = vunpack.c.l.b16 %v82
    %v212 = vunpack.c.l.b16 %v83
    %v213 = vunpack.c.l.b16 %v84
    %v214 = vunpack.c.l.b16 %v85
    %v215 = vunpack.c.l.b16 %v86
    %v216 = vunpack.c.l.b16 %v87
    %v217 = vunpack.c.l.b16 %v88
    %v218 = vunpack.c.l.b16 %v89
    %v219 = vunpack.c.l.b16 %v90
    %v220 = vunpack.c.l.b16 %v91
    %v221 = vunpack.c.l.b16 %v92
    %v222 = vunpack.c.l.b16 %v93
    %v223 = vunpack.c.l.b16 %v94
    %v224 = vunpack.c.l.b16 %v95
    %v225 = vunpack.c.l.b16 %v96
    %v226 = vunpack.c.l.b16 %v97
    %v227 = vpack.c.b16 %v164, %v163
    %v228 = vpack.c.b16 %v166, %v165
    %v229 = vpack.c.b16 %v168, %v167
    %v230 = vpack.c.b16 %v170, %v169
    %v231 = vpack.c.b16 %v172, %v171
    %v232 = vpack.c.b16 %v174, %v173
    %v233 = vpack.c.b16 %v176, %v175
    %v234 = vpack.c.b16 %v178, %v177
    %v235 = vpack.c.b16 %v180, %v179
    %v236 = vpack.c.b16 %v182, %v181
    %v237 = vpack.c.b16 %v184, %v183
    %v238 = vpack.c.b16 %v186, %v185
    %v239 = vpack.c.b16 %v188, %v187
    %v240 = vpack.c.b16 %v190, %v189
    %v241 = vpack.c.b16 %v192, %v191
    %v242 = vpack.c.b16 %v194, %v193
    %v243 = vpack.c.b16 %v196, %v195
    %v244 = vpack.c.b16 %v198, %v197
    %v245 = vpack.c.b16 %v200, %v199
    %v246 = vpack.c.b16 %v202, %v201
    %v247 = vpack.c.b16 %v204, %v203
    %v248 = vpack.c.b16 %v206, %v205
    %v249 = vpack.c.b16 %v208, %v207
    %v250 = vpack.c.b16 %v210, %v209
    %v251 = vpack.c.b16 %v212, %v211
    %v252 = vpack.c.b16 %v214, %v213
    %v253 = vpack.c.b16 %v216, %v215
    %v254 = vpack.c.b16 %v218, %v217
    %v255 = vpack.c.b16 %v220, %v219
    %v256 = vpack.c.b16 %v222, %v221
    %v257 = vpack.c.b16 %v224, %v223
    %v258 = vpack.c.b16 %v226, %v225
    %vm259 = vcmask 64512
    %v261 = vsel %vm259, %v227, 0
    %v264 = vsel %vm259, %v228, 0
    %v267 = vsel %vm259, %v229, 0
    %v270 = vsel %vm259, %v230, 0
    %v273 = vsel %vm259, %v231, 0
    %v276 = vsel %vm259, %v232, 0
    %v279 = vsel %vm259, %v233, 0
    %v282 = vsel %vm259, %v234, 0
    %v285 = vsel %vm259, %v235, 0
    %v288 = vsel %vm259, %v236, 0
    %v291 = vsel %vm259, %v237, 0
    %v294 = vsel %vm259, %v238, 0
    %v297 = vsel %vm259, %v239, 0
    %v300 = vsel %vm259, %v240, 0
    %v303 = vsel %vm259, %v241, 0
    %v306 = vsel %vm259, %v242, 0
    %v309 = vsel %vm259, %v243, 0
    %v312 = vsel %vm259, %v244, 0
    %v315 = vsel %vm259, %v245, 0
    %v318 = vsel %vm259, %v246, 0
    %v321 = vsel %vm259, %v247, 0
    %v324 = vsel %vm259, %v248, 0
    %v327 = vsel %vm259, %v249, 0
    %v330 = vsel %vm259, %v250, 0
    %v333 = vsel %vm259, %v251, 0
    %v336 = vsel %vm259, %v252, 0
    %v339 = vsel %vm259, %v253, 0
    %v342 = vsel %vm259, %v254, 0
    %v345 = vsel %vm259, %v255, 0
    %v348 = vsel %vm259, %v256, 0
    %v351 = vsel %vm259, %v257, 0
    %v354 = vsel %vm259, %v258, 0
    %vm356 = vcmask 1043456
    %v358 = vsel %vm356, %v98, 0
    %360 = vmatpush.bf16.msra.mxu0 0
    %361 = vmatpush.bf16.msra.mxu0 0
    %362 = vmatpush.bf16.msra.mxu0 0
    %363 = vmatpush.bf16.msra.mxu0 0
    %364 = vmatpush.bf16.msra.mxu0 0
    %365 = vmatpush.bf16.msra.mxu0 0
    %366 = vmatpush.bf16.msra.mxu0 0
    %367 = vmatpush.bf16.msra.mxu0 %v358
    %368 = vmatmul.bf16.gmra.mxu0 %v261
    %v369 = vpop.f32.mrf.mxu0
    %v370 = vadd.f32 0.0, %v369
    %v371 = vpop.f32.mrf.mxu0
    %v372 = vadd.f32 0.0, %v371
    %373 = vmatmul.bf16.gmra.mxu0 %v264
    %v374 = vpop.f32.mrf.mxu0
    %v375 = vadd.f32 0.0, %v374
    %v376 = vpop.f32.mrf.mxu0
    %v377 = vadd.f32 0.0, %v376
    %378 = vmatmul.bf16.gmra.mxu0 %v267
    %v379 = vpop.f32.mrf.mxu0
    %v380 = vadd.f32 0.0, %v379
    %v381 = vpop.f32.mrf.mxu0
    %v382 = vadd.f32 0.0, %v381
    %383 = vmatmul.bf16.gmra.mxu0 %v270
    %v384 = vpop.f32.mrf.mxu0
    %v385 = vadd.f32 0.0, %v384
    %v386 = vpop.f32.mrf.mxu0
    %v387 = vadd.f32 0.0, %v386
    %388 = vmatmul.bf16.gmra.mxu0 %v273
    %v389 = vpop.f32.mrf.mxu0
    %v390 = vadd.f32 0.0, %v389
    %v391 = vpop.f32.mrf.mxu0
    %v392 = vadd.f32 0.0, %v391
    %393 = vmatmul.bf16.gmra.mxu0 %v276
    %v394 = vpop.f32.mrf.mxu0
    %v395 = vadd.f32 0.0, %v394
    %v396 = vpop.f32.mrf.mxu0
    %v397 = vadd.f32 0.0, %v396
    %398 = vmatmul.bf16.gmra.mxu0 %v279
    %v399 = vpop.f32.mrf.mxu0
    %v400 = vadd.f32 0.0, %v399
    %v401 = vpop.f32.mrf.mxu0
    %v402 = vadd.f32 0.0, %v401
    %403 = vmatmul.bf16.gmra.mxu0 %v282
    %v404 = vpop.f32.mrf.mxu0
    %v405 = vadd.f32 0.0, %v404
    %v406 = vpop.f32.mrf.mxu0
    %v407 = vadd.f32 0.0, %v406
    %408 = vmatmul.bf16.gmra.mxu0 %v285
    %v409 = vpop.f32.mrf.mxu0
    %v410 = vadd.f32 0.0, %v409
    %v411 = vpop.f32.mrf.mxu0
    %v412 = vadd.f32 0.0, %v411
    %413 = vmatmul.bf16.gmra.mxu0 %v288
    %v414 = vpop.f32.mrf.mxu0
    %v415 = vadd.f32 0.0, %v414
    %v416 = vpop.f32.mrf.mxu0
    %v417 = vadd.f32 0.0, %v416
    %418 = vmatmul.bf16.gmra.mxu0 %v291
    %v419 = vpop.f32.mrf.mxu0
    %v420 = vadd.f32 0.0, %v419
    %v421 = vpop.f32.mrf.mxu0
    %v422 = vadd.f32 0.0, %v421
    %423 = vmatmul.bf16.gmra.mxu0 %v294
    %v424 = vpop.f32.mrf.mxu0
    %v425 = vadd.f32 0.0, %v424
    %v426 = vpop.f32.mrf.mxu0
    %v427 = vadd.f32 0.0, %v426
    %428 = vmatmul.bf16.gmra.mxu0 %v297
    %v429 = vpop.f32.mrf.mxu0
    %v430 = vadd.f32 0.0, %v429
    %v431 = vpop.f32.mrf.mxu0
    %v432 = vadd.f32 0.0, %v431
    %433 = vmatmul.bf16.gmra.mxu0 %v300
    %v434 = vpop.f32.mrf.mxu0
    %v435 = vadd.f32 0.0, %v434
    %v436 = vpop.f32.mrf.mxu0
    %v437 = vadd.f32 0.0, %v436
    %438 = vmatmul.bf16.gmra.mxu0 %v303
    %v439 = vpop.f32.mrf.mxu0
    %v440 = vadd.f32 0.0, %v439
    %v441 = vpop.f32.mrf.mxu0
    %v442 = vadd.f32 0.0, %v441
    %443 = vmatmul.bf16.gmra.mxu0 %v306
    %v444 = vpop.f32.mrf.mxu0
    %v445 = vadd.f32 0.0, %v444
    %v446 = vpop.f32.mrf.mxu0
    %v447 = vadd.f32 0.0, %v446
    %448 = vmatmul.bf16.gmra.mxu0 %v309
    %v449 = vpop.f32.mrf.mxu0
    %v450 = vadd.f32 0.0, %v449
    %v451 = vpop.f32.mrf.mxu0
    %v452 = vadd.f32 0.0, %v451
    %453 = vmatmul.bf16.gmra.mxu0 %v312
    %v454 = vpop.f32.mrf.mxu0
    %v455 = vadd.f32 0.0, %v454
    %v456 = vpop.f32.mrf.mxu0
    %v457 = vadd.f32 0.0, %v456
    %458 = vmatmul.bf16.gmra.mxu0 %v315
    %v459 = vpop.f32.mrf.mxu0
    %v460 = vadd.f32 0.0, %v459
    %v461 = vpop.f32.mrf.mxu0
    %v462 = vadd.f32 0.0, %v461
    %463 = vmatmul.bf16.gmra.mxu0 %v318
    %v464 = vpop.f32.mrf.mxu0
    %v465 = vadd.f32 0.0, %v464
    %v466 = vpop.f32.mrf.mxu0
    %v467 = vadd.f32 0.0, %v466
    %468 = vmatmul.bf16.gmra.mxu0 %v321
    %v469 = vpop.f32.mrf.mxu0
    %v470 = vadd.f32 0.0, %v469
    %v471 = vpop.f32.mrf.mxu0
    %v472 = vadd.f32 0.0, %v471
    %473 = vmatmul.bf16.gmra.mxu0 %v324
    %v474 = vpop.f32.mrf.mxu0
    %v475 = vadd.f32 0.0, %v474
    %v476 = vpop.f32.mrf.mxu0
    %v477 = vadd.f32 0.0, %v476
    %478 = vmatmul.bf16.gmra.mxu0 %v327
    %v479 = vpop.f32.mrf.mxu0
    %v480 = vadd.f32 0.0, %v479
    %v481 = vpop.f32.mrf.mxu0
    %v482 = vadd.f32 0.0, %v481
    %483 = vmatmul.bf16.gmra.mxu0 %v330
    %v484 = vpop.f32.mrf.mxu0
    %v485 = vadd.f32 0.0, %v484
    %v486 = vpop.f32.mrf.mxu0
    %v487 = vadd.f32 0.0, %v486
    %488 = vmatmul.bf16.gmra.mxu0 %v333
    %v489 = vpop.f32.mrf.mxu0
    %v490 = vadd.f32 0.0, %v489
    %v491 = vpop.f32.mrf.mxu0
    %v492 = vadd.f32 0.0, %v491
    %493 = vmatmul.bf16.gmra.mxu0 %v336
    %v494 = vpop.f32.mrf.mxu0
    %v495 = vadd.f32 0.0, %v494
    %v496 = vpop.f32.mrf.mxu0
    %v497 = vadd.f32 0.0, %v496
    %498 = vmatmul.bf16.gmra.mxu0 %v339
    %v499 = vpop.f32.mrf.mxu0
    %v500 = vadd.f32 0.0, %v499
    %v501 = vpop.f32.mrf.mxu0
    %v502 = vadd.f32 0.0, %v501
    %503 = vmatmul.bf16.gmra.mxu0 %v342
    %v504 = vpop.f32.mrf.mxu0
    %v505 = vadd.f32 0.0, %v504
    %v506 = vpop.f32.mrf.mxu0
    %v507 = vadd.f32 0.0, %v506
    %508 = vmatmul.bf16.gmra.mxu0 %v345
    %v509 = vpop.f32.mrf.mxu0
    %v510 = vadd.f32 0.0, %v509
    %v511 = vpop.f32.mrf.mxu0
    %v512 = vadd.f32 0.0, %v511
    %513 = vmatmul.bf16.gmra.mxu0 %v348
    %v514 = vpop.f32.mrf.mxu0
    %v515 = vadd.f32 0.0, %v514
    %v516 = vpop.f32.mrf.mxu0
    %v517 = vadd.f32 0.0, %v516
    %518 = vmatmul.bf16.gmra.mxu0 %v351
    %v519 = vpop.f32.mrf.mxu0
    %v520 = vadd.f32 0.0, %v519
    %v521 = vpop.f32.mrf.mxu0
    %v522 = vadd.f32 0.0, %v521
    %523 = vmatmul.bf16.gmra.mxu0 %v354
    %v524 = vpop.f32.mrf.mxu0
    %v525 = vadd.f32 0.0, %v524
    %v526 = vpop.f32.mrf.mxu0
    %v527 = vadd.f32 0.0, %v526
    %528 = vdwg.mxu0
    %v529 = vmax.f32 %v370, 0.0
    %v530 = vmax.f32 %v372, 0.0
    %v531 = vmax.f32 %v375, 0.0
    %v532 = vmax.f32 %v377, 0.0
    %v533 = vmax.f32 %v380, 0.0
    %v534 = vmax.f32 %v382, 0.0
    %v535 = vmax.f32 %v385, 0.0
    %v536 = vmax.f32 %v387, 0.0
    %v537 = vmax.f32 %v390, 0.0
    %v538 = vmax.f32 %v392, 0.0
    %v539 = vmax.f32 %v395, 0.0
    %v540 = vmax.f32 %v397, 0.0
    %v541 = vmax.f32 %v400, 0.0
    %v542 = vmax.f32 %v402, 0.0
    %v543 = vmax.f32 %v405, 0.0
    %v544 = vmax.f32 %v407, 0.0
    %v545 = vmax.f32 %v410, 0.0
    %v546 = vmax.f32 %v412, 0.0
    %v547 = vmax.f32 %v415, 0.0
    %v548 = vmax.f32 %v417, 0.0
    %v549 = vmax.f32 %v420, 0.0
    %v550 = vmax.f32 %v422, 0.0
    %v551 = vmax.f32 %v425, 0.0
    %v552 = vmax.f32 %v427, 0.0
    %v553 = vmax.f32 %v430, 0.0
    %v554 = vmax.f32 %v432, 0.0
    %v555 = vmax.f32 %v435, 0.0
    %v556 = vmax.f32 %v437, 0.0
    %v557 = vmax.f32 %v440, 0.0
    %v558 = vmax.f32 %v442, 0.0
    %v559 = vmax.f32 %v445, 0.0
    %v560 = vmax.f32 %v447, 0.0
    %v561 = vmax.f32 %v450, 0.0
    %v562 = vmax.f32 %v452, 0.0
    %v563 = vmax.f32 %v455, 0.0
    %v564 = vmax.f32 %v457, 0.0
    %v565 = vmax.f32 %v460, 0.0
    %v566 = vmax.f32 %v462, 0.0
    %v567 = vmax.f32 %v465, 0.0
    %v568 = vmax.f32 %v467, 0.0
    %v569 = vmax.f32 %v470, 0.0
    %v570 = vmax.f32 %v472, 0.0
    %v571 = vmax.f32 %v475, 0.0
    %v572 = vmax.f32 %v477, 0.0
    %v573 = vmax.f32 %v480, 0.0
    %v574 = vmax.f32 %v482, 0.0
    %v575 = vmax.f32 %v485, 0.0
    %v576 = vmax.f32 %v487, 0.0
    %v577 = vmax.f32 %v490, 0.0
    %v578 = vmax.f32 %v492, 0.0
    %v579 = vmax.f32 %v495, 0.0
    %v580 = vmax.f32 %v497, 0.0
    %v581 = vmax.f32 %v500, 0.0
    %v582 = vmax.f32 %v502, 0.0
    %v583 = vmax.f32 %v505, 0.0
    %v584 = vmax.f32 %v507, 0.0
    %v585 = vmax.f32 %v510, 0.0
    %v586 = vmax.f32 %v512, 0.0
    %v587 = vmax.f32 %v515, 0.0
    %v588 = vmax.f32 %v517, 0.0
    %v589 = vmax.f32 %v520, 0.0
    %v590 = vmax.f32 %v522, 0.0
    %v591 = vmax.f32 %v525, 0.0
    %v592 = vmax.f32 %v527, 0.0
    %v593 = vpack.c.bf16 %v530, %v529
    %v594 = vpack.c.bf16 %v532, %v531
    %v595 = vpack.c.bf16 %v534, %v533
    %v596 = vpack.c.bf16 %v536, %v535
    %v597 = vpack.c.bf16 %v538, %v537
    %v598 = vpack.c.bf16 %v540, %v539
    %v599 = vpack.c.bf16 %v542, %v541
    %v600 = vpack.c.bf16 %v544, %v543
    %v601 = vpack.c.bf16 %v546, %v545
    %v602 = vpack.c.bf16 %v548, %v547
    %v603 = vpack.c.bf16 %v550, %v549
    %v604 = vpack.c.bf16 %v552, %v551
    %v605 = vpack.c.bf16 %v554, %v553
    %v606 = vpack.c.bf16 %v556, %v555
    %v607 = vpack.c.bf16 %v558, %v557
    %v608 = vpack.c.bf16 %v560, %v559
    %v609 = vpack.c.bf16 %v562, %v561
    %v610 = vpack.c.bf16 %v564, %v563
    %v611 = vpack.c.bf16 %v566, %v565
    %v612 = vpack.c.bf16 %v568, %v567
    %v613 = vpack.c.bf16 %v570, %v569
    %v614 = vpack.c.bf16 %v572, %v571
    %v615 = vpack.c.bf16 %v574, %v573
    %v616 = vpack.c.bf16 %v576, %v575
    %v617 = vpack.c.bf16 %v578, %v577
    %v618 = vpack.c.bf16 %v580, %v579
    %v619 = vpack.c.bf16 %v582, %v581
    %v620 = vpack.c.bf16 %v584, %v583
    %v621 = vpack.c.bf16 %v586, %v585
    %v622 = vpack.c.bf16 %v588, %v587
    %v623 = vpack.c.bf16 %v590, %v589
    %v624 = vpack.c.bf16 %v592, %v591
    %v625 = vld [vmem:[#allocation2] sm:$0xff]
    %v626 = vld [vmem:[#allocation2 + $0x8] sm:$0xff]
    %v627 = vld [vmem:[#allocation2 + $0x10] sm:$0xff]
    %v628 = vld [vmem:[#allocation2 + $0x18] sm:$0xff]
    %v629 = vld [vmem:[#allocation2 + $0x20] sm:$0xff]
    %v630 = vld [vmem:[#allocation2 + $0x28] sm:$0xff]
    %v631 = vld [vmem:[#allocation2 + $0x30] sm:$0xff]
    %v632 = vld [vmem:[#allocation2 + $0x38] sm:$0xff]
    %v633 = vld [vmem:[#allocation2 + $0x40] sm:$0xff]
    %v634 = vld [vmem:[#allocation2 + $0x48] sm:$0xff]
    %v635 = vld [vmem:[#allocation2 + $0x50] sm:$0xff]
    %v636 = vld [vmem:[#allocation2 + $0x58] sm:$0xff]
    %v637 = vld [vmem:[#allocation2 + $0x60] sm:$0xff]
    %v638 = vld [vmem:[#allocation2 + $0x68] sm:$0xff]
    %v639 = vld [vmem:[#allocation2 + $0x70] sm:$0xff]
    %v640 = vld [vmem:[#allocation2 + $0x78] sm:$0xff]
    %v641 = vld [vmem:[#allocation2 + $0x80] sm:$0xff]
    %v642 = vld [vmem:[#allocation2 + $0x88] sm:$0xff]
    %v643 = vld [vmem:[#allocation2 + $0x90] sm:$0xff]
    %v644 = vld [vmem:[#allocation2 + $0x98] sm:$0xff]
    %v645 = vld [vmem:[#allocation2 + $0xa0] sm:$0xff]
    %v646 = vld [vmem:[#allocation2 + $0xa8] sm:$0xff]
    %v647 = vld [vmem:[#allocation2 + $0xb0] sm:$0xff]
    %v648 = vld [vmem:[#allocation2 + $0xb8] sm:$0xff]
    %v649 = vld [vmem:[#allocation2 + $0xc0] sm:$0xff]
    %v650 = vld [vmem:[#allocation2 + $0xc8] sm:$0xff]
    %v651 = vld [vmem:[#allocation2 + $0xd0] sm:$0xff]
    %v652 = vld [vmem:[#allocation2 + $0xd8] sm:$0xff]
    %v653 = vld [vmem:[#allocation2 + $0xe0] sm:$0xff]
    %v654 = vld [vmem:[#allocation2 + $0xe8] sm:$0xff]
    %v655 = vld [vmem:[#allocation2 + $0xf0] sm:$0xff]
    %v656 = vld [vmem:[#allocation2 + $0xf8] sm:$0xff]
    %v657 = vld [vmem:[#allocation2 + $0x100] sm:$0xff]
    %v658 = vld [vmem:[#allocation2 + $0x108] sm:$0xff]
    %v659 = vld [vmem:[#allocation2 + $0x110] sm:$0xff]
    %v660 = vld [vmem:[#allocation2 + $0x118] sm:$0xff]
    %v661 = vld [vmem:[#allocation2 + $0x120] sm:$0xff]
    %v662 = vld [vmem:[#allocation2 + $0x128] sm:$0xff]
    %v663 = vld [vmem:[#allocation2 + $0x130] sm:$0xff]
    %v664 = vld [vmem:[#allocation2 + $0x138] sm:$0xff]
    %v665 = vld [vmem:[#allocation2 + $0x140] sm:$0xff]
    %v666 = vld [vmem:[#allocation2 + $0x148] sm:$0xff]
    %v667 = vld [vmem:[#allocation2 + $0x150] sm:$0xff]
    %v668 = vld [vmem:[#allocation2 + $0x158] sm:$0xff]
    %v669 = vld [vmem:[#allocation2 + $0x160] sm:$0xff]
    %v670 = vld [vmem:[#allocation2 + $0x168] sm:$0xff]
    %v671 = vld [vmem:[#allocation2 + $0x170] sm:$0xff]
    %v672 = vld [vmem:[#allocation2 + $0x178] sm:$0xff]
    %v673 = vld [vmem:[#allocation2 + $0x180] sm:$0xff]
    %v674 = vld [vmem:[#allocation2 + $0x188] sm:$0xff]
    %v675 = vld [vmem:[#allocation2 + $0x190] sm:$0xff]
    %v676 = vld [vmem:[#allocation2 + $0x198] sm:$0xff]
    %v677 = vld [vmem:[#allocation2 + $0x1a0] sm:$0xff]
    %v678 = vld [vmem:[#allocation2 + $0x1a8] sm:$0xff]
    %v679 = vld [vmem:[#allocation2 + $0x1b0] sm:$0xff]
    %v680 = vld [vmem:[#allocation2 + $0x1b8] sm:$0xff]
    %v681 = vld [vmem:[#allocation2 + $0x1c0] sm:$0xff]
    %v682 = vld [vmem:[#allocation2 + $0x1c8] sm:$0xff]
    %v683 = vld [vmem:[#allocation2 + $0x1d0] sm:$0xff]
    %v684 = vld [vmem:[#allocation2 + $0x1d8] sm:$0xff]
    %v685 = vld [vmem:[#allocation2 + $0x1e0] sm:$0xff]
    %v686 = vld [vmem:[#allocation2 + $0x1e8] sm:$0xff]
    %v687 = vld [vmem:[#allocation2 + $0x1f0] sm:$0xff]
    %v688 = vld [vmem:[#allocation2 + $0x1f8] sm:$0xff]
    %v689 = vld [vmem:[#allocation2 + $0x200] sm:$0xff]
    %v690 = vld [vmem:[#allocation2 + $0x208] sm:$0xff]
    %v691 = vld [vmem:[#allocation2 + $0x210] sm:$0xff]
    %v692 = vld [vmem:[#allocation2 + $0x218] sm:$0xff]
    %v693 = vld [vmem:[#allocation2 + $0x220] sm:$0xff]
    %v694 = vld [vmem:[#allocation2 + $0x228] sm:$0xff]
    %v695 = vld [vmem:[#allocation2 + $0x230] sm:$0xff]
    %v696 = vld [vmem:[#allocation2 + $0x238] sm:$0xff]
    %v697 = vld [vmem:[#allocation2 + $0x240] sm:$0xff]
    %v698 = vld [vmem:[#allocation2 + $0x248] sm:$0xff]
    %v699 = vld [vmem:[#allocation2 + $0x250] sm:$0xff]
    %v700 = vld [vmem:[#allocation2 + $0x258] sm:$0xff]
    %v701 = vld [vmem:[#allocation2 + $0x260] sm:$0xff]
    %v702 = vld [vmem:[#allocation2 + $0x268] sm:$0xff]
    %v703 = vld [vmem:[#allocation2 + $0x270] sm:$0xff]
    %v704 = vld [vmem:[#allocation2 + $0x278] sm:$0xff]
    %v705 = vld [vmem:[#allocation2 + $0x280] sm:$0xff]
    %v706 = vld [vmem:[#allocation2 + $0x288] sm:$0xff]
    %v707 = vld [vmem:[#allocation2 + $0x290] sm:$0xff]
    %v708 = vld [vmem:[#allocation2 + $0x298] sm:$0xff]
    %v709 = vld [vmem:[#allocation2 + $0x2a0] sm:$0xff]
    %v710 = vld [vmem:[#allocation2 + $0x2a8] sm:$0xff]
    %v711 = vld [vmem:[#allocation2 + $0x2b0] sm:$0xff]
    %v712 = vld [vmem:[#allocation2 + $0x2b8] sm:$0xff]
    %v713 = vld [vmem:[#allocation2 + $0x2c0] sm:$0xff]
    %v714 = vld [vmem:[#allocation2 + $0x2c8] sm:$0xff]
    %v715 = vld [vmem:[#allocation2 + $0x2d0] sm:$0xff]
    %v716 = vld [vmem:[#allocation2 + $0x2d8] sm:$0xff]
    %v717 = vld [vmem:[#allocation2 + $0x2e0] sm:$0xff]
    %v718 = vld [vmem:[#allocation2 + $0x2e8] sm:$0xff]
    %v719 = vld [vmem:[#allocation2 + $0x2f0] sm:$0xff]
    %v720 = vld [vmem:[#allocation2 + $0x2f8] sm:$0xff]
    %v817 = vunpack.c.l.b16 %v625
    %v818 = vunpack.c.h.b16 %v625
    %v819 = vunpack.c.l.b16 %v626
    %v820 = vunpack.c.h.b16 %v626
    %v821 = vunpack.c.l.b16 %v627
    %v822 = vunpack.c.h.b16 %v627
    %v823 = vunpack.c.l.b16 %v628
    %v824 = vunpack.c.h.b16 %v628
    %v825 = vunpack.c.l.b16 %v629
    %v826 = vunpack.c.h.b16 %v629
    %v827 = vunpack.c.l.b16 %v630
    %v828 = vunpack.c.h.b16 %v630
    %v829 = vunpack.c.l.b16 %v631
    %v830 = vunpack.c.h.b16 %v631
    %v831 = vunpack.c.l.b16 %v632
    %v832 = vunpack.c.h.b16 %v632
    %v833 = vunpack.c.l.b16 %v633
    %v834 = vunpack.c.h.b16 %v633
    %v835 = vunpack.c.l.b16 %v634
    %v836 = vunpack.c.h.b16 %v634
    %v837 = vunpack.c.l.b16 %v635
    %v838 = vunpack.c.h.b16 %v635
    %v839 = vunpack.c.l.b16 %v636
    %v840 = vunpack.c.h.b16 %v636
    %v841 = vunpack.c.l.b16 %v637
    %v842 = vunpack.c.h.b16 %v637
    %v843 = vunpack.c.l.b16 %v638
    %v844 = vunpack.c.h.b16 %v638
    %v845 = vunpack.c.l.b16 %v639
    %v846 = vunpack.c.h.b16 %v639
    %v847 = vunpack.c.l.b16 %v640
    %v848 = vunpack.c.h.b16 %v640
    %v849 = vunpack.c.l.b16 %v641
    %v850 = vunpack.c.h.b16 %v641
    %v851 = vunpack.c.l.b16 %v642
    %v852 = vunpack.c.h.b16 %v642
    %v853 = vunpack.c.l.b16 %v643
    %v854 = vunpack.c.h.b16 %v643
    %v855 = vunpack.c.l.b16 %v644
    %v856 = vunpack.c.h.b16 %v644
    %v857 = vunpack.c.l.b16 %v645
    %v858 = vunpack.c.h.b16 %v645
    %v859 = vunpack.c.l.b16 %v646
    %v860 = vunpack.c.h.b16 %v646
    %v861 = vunpack.c.l.b16 %v647
    %v862 = vunpack.c.h.b16 %v647
    %v863 = vunpack.c.l.b16 %v648
    %v864 = vunpack.c.h.b16 %v648
    %v865 = vunpack.c.l.b16 %v649
    %v866 = vunpack.c.h.b16 %v649
    %v867 = vunpack.c.l.b16 %v650
    %v868 = vunpack.c.h.b16 %v650
    %v869 = vunpack.c.l.b16 %v651
    %v870 = vunpack.c.h.b16 %v651
    %v871 = vunpack.c.l.b16 %v652
    %v872 = vunpack.c.h.b16 %v652
    %v873 = vunpack.c.l.b16 %v653
    %v874 = vunpack.c.h.b16 %v653
    %v875 = vunpack.c.l.b16 %v654
    %v876 = vunpack.c.h.b16 %v654
    %v877 = vunpack.c.l.b16 %v655
    %v878 = vunpack.c.h.b16 %v655
    %v879 = vunpack.c.l.b16 %v656
    %v880 = vunpack.c.h.b16 %v656
    %v881 = vunpack.c.l.b16 %v657
    %v882 = vunpack.c.h.b16 %v657
    %v883 = vunpack.c.l.b16 %v658
    %v884 = vunpack.c.h.b16 %v658
    %v885 = vunpack.c.l.b16 %v659
    %v886 = vunpack.c.h.b16 %v659
    %v887 = vunpack.c.l.b16 %v660
    %v888 = vunpack.c.h.b16 %v660
    %v889 = vunpack.c.l.b16 %v661
    %v890 = vunpack.c.h.b16 %v661
    %v891 = vunpack.c.l.b16 %v662
    %v892 = vunpack.c.h.b16 %v662
    %v893 = vunpack.c.l.b16 %v663
    %v894 = vunpack.c.h.b16 %v663
    %v895 = vunpack.c.l.b16 %v664
    %v896 = vunpack.c.h.b16 %v664
    %v897 = vunpack.c.l.b16 %v665
    %v898 = vunpack.c.h.b16 %v665
    %v899 = vunpack.c.l.b16 %v666
    %v900 = vunpack.c.h.b16 %v666
    %v901 = vunpack.c.l.b16 %v667
    %v902 = vunpack.c.h.b16 %v667
    %v903 = vunpack.c.l.b16 %v668
    %v904 = vunpack.c.h.b16 %v668
    %v905 = vunpack.c.l.b16 %v669
    %v906 = vunpack.c.h.b16 %v669
    %v907 = vunpack.c.l.b16 %v670
    %v908 = vunpack.c.h.b16 %v670
    %v909 = vunpack.c.l.b16 %v671
    %v910 = vunpack.c.h.b16 %v671
    %v911 = vunpack.c.l.b16 %v672
    %v912 = vunpack.c.h.b16 %v672
    %v913 = vunpack.c.l.b16 %v673
    %v914 = vunpack.c.h.b16 %v673
    %v915 = vunpack.c.l.b16 %v674
    %v916 = vunpack.c.h.b16 %v674
    %v917 = vunpack.c.l.b16 %v675
    %v918 = vunpack.c.h.b16 %v675
    %v919 = vunpack.c.l.b16 %v676
    %v920 = vunpack.c.h.b16 %v676
    %v921 = vunpack.c.l.b16 %v677
    %v922 = vunpack.c.h.b16 %v677
    %v923 = vunpack.c.l.b16 %v678
    %v924 = vunpack.c.h.b16 %v678
    %v925 = vunpack.c.l.b16 %v679
    %v926 = vunpack.c.h.b16 %v679
    %v927 = vunpack.c.l.b16 %v680
    %v928 = vunpack.c.h.b16 %v680
    %v929 = vunpack.c.l.b16 %v681
    %v930 = vunpack.c.h.b16 %v681
    %v931 = vunpack.c.l.b16 %v682
    %v932 = vunpack.c.h.b16 %v682
    %v933 = vunpack.c.l.b16 %v683
    %v934 = vunpack.c.h.b16 %v683
    %v935 = vunpack.c.l.b16 %v684
    %v936 = vunpack.c.h.b16 %v684
    %v937 = vunpack.c.l.b16 %v685
    %v938 = vunpack.c.h.b16 %v685
    %v939 = vunpack.c.l.b16 %v686
    %v940 = vunpack.c.h.b16 %v686
    %v941 = vunpack.c.l.b16 %v687
    %v942 = vunpack.c.h.b16 %v687
    %v943 = vunpack.c.l.b16 %v688
    %v944 = vunpack.c.h.b16 %v688
    %v945 = vunpack.c.l.b16 %v689
    %v946 = vunpack.c.h.b16 %v689
    %v947 = vunpack.c.l.b16 %v690
    %v948 = vunpack.c.h.b16 %v690
    %v949 = vunpack.c.l.b16 %v691
    %v950 = vunpack.c.h.b16 %v691
    %v951 = vunpack.c.l.b16 %v692
    %v952 = vunpack.c.h.b16 %v692
    %v953 = vunpack.c.l.b16 %v693
    %v954 = vunpack.c.h.b16 %v693
    %v955 = vunpack.c.l.b16 %v694
    %v956 = vunpack.c.h.b16 %v694
    %v957 = vunpack.c.l.b16 %v695
    %v958 = vunpack.c.h.b16 %v695
    %v959 = vunpack.c.l.b16 %v696
    %v960 = vunpack.c.h.b16 %v696
    %v961 = vunpack.c.l.b16 %v697
    %v962 = vunpack.c.h.b16 %v697
    %v963 = vunpack.c.l.b16 %v698
    %v964 = vunpack.c.h.b16 %v698
    %v965 = vunpack.c.l.b16 %v699
    %v966 = vunpack.c.h.b16 %v699
    %v967 = vunpack.c.l.b16 %v700
    %v968 = vunpack.c.h.b16 %v700
    %v969 = vunpack.c.l.b16 %v701
    %v970 = vunpack.c.h.b16 %v701
    %v971 = vunpack.c.l.b16 %v702
    %v972 = vunpack.c.h.b16 %v702
    %v973 = vunpack.c.l.b16 %v703
    %v974 = vunpack.c.h.b16 %v703
    %v975 = vunpack.c.l.b16 %v704
    %v976 = vunpack.c.h.b16 %v704
    %v977 = vunpack.c.l.b16 %v705
    %v978 = vunpack.c.h.b16 %v705
    %v979 = vunpack.c.l.b16 %v706
    %v980 = vunpack.c.h.b16 %v706
    %v981 = vunpack.c.l.b16 %v707
    %v982 = vunpack.c.h.b16 %v707
    %v983 = vunpack.c.l.b16 %v708
    %v984 = vunpack.c.h.b16 %v708
    %v985 = vunpack.c.l.b16 %v709
    %v986 = vunpack.c.h.b16 %v709
    %v987 = vunpack.c.l.b16 %v710
    %v988 = vunpack.c.h.b16 %v710
    %v989 = vunpack.c.l.b16 %v711
    %v990 = vunpack.c.h.b16 %v711
    %v991 = vunpack.c.l.b16 %v712
    %v992 = vunpack.c.h.b16 %v712
    %v993 = vunpack.c.l.b16 %v713
    %v994 = vunpack.c.h.b16 %v713
    %v995 = vunpack.c.l.b16 %v714
    %v996 = vunpack.c.h.b16 %v714
    %v997 = vunpack.c.l.b16 %v715
    %v998 = vunpack.c.h.b16 %v715
    %v999 = vunpack.c.l.b16 %v716
    %v1000 = vunpack.c.h.b16 %v716
    %v1001 = vunpack.c.l.b16 %v717
    %v1002 = vunpack.c.h.b16 %v717
    %v1003 = vunpack.c.l.b16 %v718
    %v1004 = vunpack.c.h.b16 %v718
    %v1005 = vunpack.c.l.b16 %v719
    %v1006 = vunpack.c.h.b16 %v719
    %v1007 = vunpack.c.l.b16 %v720
    %v1008 = vunpack.c.h.b16 %v720
    %v1009 = vpack.c.b16 %v821, %v817
    %v1010 = vpack.c.b16 %v822, %v818
    %v1011 = vpack.c.b16 %v823, %v819
    %v1012 = vpack.c.b16 %v824, %v820
    %v1013 = vpack.c.b16 %v829, %v825
    %v1014 = vpack.c.b16 %v830, %v826
    %v1015 = vpack.c.b16 %v831, %v827
    %v1016 = vpack.c.b16 %v832, %v828
    %v1017 = vpack.c.b16 %v837, %v833
    %v1018 = vpack.c.b16 %v838, %v834
    %v1019 = vpack.c.b16 %v839, %v835
    %v1020 = vpack.c.b16 %v840, %v836
    %v1021 = vpack.c.b16 %v845, %v841
    %v1022 = vpack.c.b16 %v846, %v842
    %v1023 = vpack.c.b16 %v847, %v843
    %v1024 = vpack.c.b16 %v848, %v844
    %v1025 = vpack.c.b16 %v853, %v849
    %v1026 = vpack.c.b16 %v854, %v850
    %v1027 = vpack.c.b16 %v855, %v851
    %v1028 = vpack.c.b16 %v856, %v852
    %v1029 = vpack.c.b16 %v861, %v857
    %v1030 = vpack.c.b16 %v862, %v858
    %v1031 = vpack.c.b16 %v863, %v859
    %v1032 = vpack.c.b16 %v864, %v860
    %v1033 = vpack.c.b16 %v869, %v865
    %v1034 = vpack.c.b16 %v870, %v866
    %v1035 = vpack.c.b16 %v871, %v867
    %v1036 = vpack.c.b16 %v872, %v868
    %v1037 = vpack.c.b16 %v877, %v873
    %v1038 = vpack.c.b16 %v878, %v874
    %v1039 = vpack.c.b16 %v879, %v875
    %v1040 = vpack.c.b16 %v880, %v876
    %v1041 = vpack.c.b16 %v885, %v881
    %v1042 = vpack.c.b16 %v886, %v882
    %v1043 = vpack.c.b16 %v887, %v883
    %v1044 = vpack.c.b16 %v888, %v884
    %v1045 = vpack.c.b16 %v893, %v889
    %v1046 = vpack.c.b16 %v894, %v890
    %v1047 = vpack.c.b16 %v895, %v891
    %v1048 = vpack.c.b16 %v896, %v892
    %v1049 = vpack.c.b16 %v901, %v897
    %v1050 = vpack.c.b16 %v902, %v898
    %v1051 = vpack.c.b16 %v903, %v899
    %v1052 = vpack.c.b16 %v904, %v900
    %v1053 = vpack.c.b16 %v909, %v905
    %v1054 = vpack.c.b16 %v910, %v906
    %v1055 = vpack.c.b16 %v911, %v907
    %v1056 = vpack.c.b16 %v912, %v908
    %v1057 = vpack.c.b16 %v917, %v913
    %v1058 = vpack.c.b16 %v918, %v914
    %v1059 = vpack.c.b16 %v919, %v915
    %v1060 = vpack.c.b16 %v920, %v916
    %v1061 = vpack.c.b16 %v925, %v921
    %v1062 = vpack.c.b16 %v926, %v922
    %v1063 = vpack.c.b16 %v927, %v923
    %v1064 = vpack.c.b16 %v928, %v924
    %v1065 = vpack.c.b16 %v933, %v929
    %v1066 = vpack.c.b16 %v934, %v930
    %v1067 = vpack.c.b16 %v935, %v931
    %v1068 = vpack.c.b16 %v936, %v932
    %v1069 = vpack.c.b16 %v941, %v937
    %v1070 = vpack.c.b16 %v942, %v938
    %v1071 = vpack.c.b16 %v943, %v939
    %v1072 = vpack.c.b16 %v944, %v940
    %v1073 = vpack.c.b16 %v949, %v945
    %v1074 = vpack.c.b16 %v950, %v946
    %v1075 = vpack.c.b16 %v951, %v947
    %v1076 = vpack.c.b16 %v952, %v948
    %v1077 = vpack.c.b16 %v957, %v953
    %v1078 = vpack.c.b16 %v958, %v954
    %v1079 = vpack.c.b16 %v959, %v955
    %v1080 = vpack.c.b16 %v960, %v956
    %v1081 = vpack.c.b16 %v965, %v961
    %v1082 = vpack.c.b16 %v966, %v962
    %v1083 = vpack.c.b16 %v967, %v963
    %v1084 = vpack.c.b16 %v968, %v964
    %v1085 = vpack.c.b16 %v973, %v969
    %v1086 = vpack.c.b16 %v974, %v970
    %v1087 = vpack.c.b16 %v975, %v971
    %v1088 = vpack.c.b16 %v976, %v972
    %v1089 = vpack.c.b16 %v981, %v977
    %v1090 = vpack.c.b16 %v982, %v978
    %v1091 = vpack.c.b16 %v983, %v979
    %v1092 = vpack.c.b16 %v984, %v980
    %v1093 = vpack.c.b16 %v989, %v985
    %v1094 = vpack.c.b16 %v990, %v986
    %v1095 = vpack.c.b16 %v991, %v987
    %v1096 = vpack.c.b16 %v992, %v988
    %v1097 = vpack.c.b16 %v997, %v993
    %v1098 = vpack.c.b16 %v998, %v994
    %v1099 = vpack.c.b16 %v999, %v995
    %v1100 = vpack.c.b16 %v1000, %v996
    %v1101 = vpack.c.b16 %v1005, %v1001
    %v1102 = vpack.c.b16 %v1006, %v1002
    %v1103 = vpack.c.b16 %v1007, %v1003
    %v1104 = vpack.c.b16 %v1008, %v1004
    %1201 = vmatpush.bf16.msra.mxu0 %v600
    %1202 = vmatpush.bf16.msra.mxu0 %v599
    %1203 = vmatpush.bf16.msra.mxu0 %v598
    %1204 = vmatpush.bf16.msra.mxu0 %v597
    %1205 = vmatpush.bf16.msra.mxu0 %v596
    %1206 = vmatpush.bf16.msra.mxu0 %v595
    %1207 = vmatpush.bf16.msra.mxu0 %v594
    %1208 = vmatpush.bf16.msra.mxu0 %v593
    %1209 = vmatmul.bf16.gmra.mxu0 %v1009
    %v1210 = vpop.f32.mrf.mxu0
    %v1211 = vadd.f32 0.0, %v1210
    %v1212 = vpop.f32.mrf.mxu0
    %v1213 = vadd.f32 0.0, %v1212
    %1214 = vmatmul.bf16.gmra.mxu0 %v1013
    %v1215 = vpop.f32.mrf.mxu0
    %v1216 = vadd.f32 0.0, %v1215
    %v1217 = vpop.f32.mrf.mxu0
    %v1218 = vadd.f32 0.0, %v1217
    %1219 = vmatmul.bf16.gmra.mxu0 %v1017
    %v1220 = vpop.f32.mrf.mxu0
    %v1221 = vadd.f32 0.0, %v1220
    %v1222 = vpop.f32.mrf.mxu0
    %v1223 = vadd.f32 0.0, %v1222
    %1224 = vmatmul.bf16.gmra.mxu0 %v1021
    %v1225 = vpop.f32.mrf.mxu0
    %v1226 = vadd.f32 0.0, %v1225
    %v1227 = vpop.f32.mrf.mxu0
    %v1228 = vadd.f32 0.0, %v1227
    %1229 = vmatmul.bf16.gmra.mxu0 %v1025
    %v1230 = vpop.f32.mrf.mxu0
    %v1231 = vadd.f32 0.0, %v1230
    %v1232 = vpop.f32.mrf.mxu0
    %v1233 = vadd.f32 0.0, %v1232
    %1234 = vmatmul.bf16.gmra.mxu0 %v1029
    %v1235 = vpop.f32.mrf.mxu0
    %v1236 = vadd.f32 0.0, %v1235
    %v1237 = vpop.f32.mrf.mxu0
    %v1238 = vadd.f32 0.0, %v1237
    %1239 = vmatmul.bf16.gmra.mxu0 %v1033
    %v1240 = vpop.f32.mrf.mxu0
    %v1241 = vadd.f32 0.0, %v1240
    %v1242 = vpop.f32.mrf.mxu0
    %v1243 = vadd.f32 0.0, %v1242
    %1244 = vmatmul.bf16.gmra.mxu0 %v1037
    %v1245 = vpop.f32.mrf.mxu0
    %v1246 = vadd.f32 0.0, %v1245
    %v1247 = vpop.f32.mrf.mxu0
    %v1248 = vadd.f32 0.0, %v1247
    %1249 = vmatmul.bf16.gmra.mxu0 %v1041
    %v1250 = vpop.f32.mrf.mxu0
    %v1251 = vadd.f32 0.0, %v1250
    %v1252 = vpop.f32.mrf.mxu0
    %v1253 = vadd.f32 0.0, %v1252
    %1254 = vmatmul.bf16.gmra.mxu0 %v1045
    %v1255 = vpop.f32.mrf.mxu0
    %v1256 = vadd.f32 0.0, %v1255
    %v1257 = vpop.f32.mrf.mxu0
    %v1258 = vadd.f32 0.0, %v1257
    %1259 = vmatmul.bf16.gmra.mxu0 %v1049
    %v1260 = vpop.f32.mrf.mxu0
    %v1261 = vadd.f32 0.0, %v1260
    %v1262 = vpop.f32.mrf.mxu0
    %v1263 = vadd.f32 0.0, %v1262
    %1264 = vmatmul.bf16.gmra.mxu0 %v1053
    %v1265 = vpop.f32.mrf.mxu0
    %v1266 = vadd.f32 0.0, %v1265
    %v1267 = vpop.f32.mrf.mxu0
    %v1268 = vadd.f32 0.0, %v1267
    %1269 = vmatmul.bf16.gmra.mxu0 %v1057
    %v1270 = vpop.f32.mrf.mxu0
    %v1271 = vadd.f32 0.0, %v1270
    %v1272 = vpop.f32.mrf.mxu0
    %v1273 = vadd.f32 0.0, %v1272
    %1274 = vmatmul.bf16.gmra.mxu0 %v1061
    %v1275 = vpop.f32.mrf.mxu0
    %v1276 = vadd.f32 0.0, %v1275
    %v1277 = vpop.f32.mrf.mxu0
    %v1278 = vadd.f32 0.0, %v1277
    %1279 = vmatmul.bf16.gmra.mxu0 %v1065
    %v1280 = vpop.f32.mrf.mxu0
    %v1281 = vadd.f32 0.0, %v1280
    %v1282 = vpop.f32.mrf.mxu0
    %v1283 = vadd.f32 0.0, %v1282
    %1284 = vmatmul.bf16.gmra.mxu0 %v1069
    %v1285 = vpop.f32.mrf.mxu0
    %v1286 = vadd.f32 0.0, %v1285
    %v1287 = vpop.f32.mrf.mxu0
    %v1288 = vadd.f32 0.0, %v1287
    %1289 = vmatmul.bf16.gmra.mxu0 %v1073
    %v1290 = vpop.f32.mrf.mxu0
    %v1291 = vadd.f32 0.0, %v1290
    %v1292 = vpop.f32.mrf.mxu0
    %v1293 = vadd.f32 0.0, %v1292
    %1294 = vmatmul.bf16.gmra.mxu0 %v1077
    %v1295 = vpop.f32.mrf.mxu0
    %v1296 = vadd.f32 0.0, %v1295
    %v1297 = vpop.f32.mrf.mxu0
    %v1298 = vadd.f32 0.0, %v1297
    %1299 = vmatmul.bf16.gmra.mxu0 %v1081
    %v1300 = vpop.f32.mrf.mxu0
    %v1301 = vadd.f32 0.0, %v1300
    %v1302 = vpop.f32.mrf.mxu0
    %v1303 = vadd.f32 0.0, %v1302
    %1304 = vmatmul.bf16.gmra.mxu0 %v1085
    %v1305 = vpop.f32.mrf.mxu0
    %v1306 = vadd.f32 0.0, %v1305
    %v1307 = vpop.f32.mrf.mxu0
    %v1308 = vadd.f32 0.0, %v1307
    %1309 = vmatmul.bf16.gmra.mxu0 %v1089
    %v1310 = vpop.f32.mrf.mxu0
    %v1311 = vadd.f32 0.0, %v1310
    %v1312 = vpop.f32.mrf.mxu0
    %v1313 = vadd.f32 0.0, %v1312
    %1314 = vmatmul.bf16.gmra.mxu0 %v1093
    %v1315 = vpop.f32.mrf.mxu0
    %v1316 = vadd.f32 0.0, %v1315
    %v1317 = vpop.f32.mrf.mxu0
    %v1318 = vadd.f32 0.0, %v1317
    %1319 = vmatmul.bf16.gmra.mxu0 %v1097
    %v1320 = vpop.f32.mrf.mxu0
    %v1321 = vadd.f32 0.0, %v1320
    %v1322 = vpop.f32.mrf.mxu0
    %v1323 = vadd.f32 0.0, %v1322
    %1324 = vmatmul.bf16.gmra.mxu0 %v1101
    %v1325 = vpop.f32.mrf.mxu0
    %v1326 = vadd.f32 0.0, %v1325
    %v1327 = vpop.f32.mrf.mxu0
    %v1328 = vadd.f32 0.0, %v1327
    %1329 = vdwg.mxu0
    %1330 = vmatpush.bf16.msra.mxu0 %v608
    %1331 = vmatpush.bf16.msra.mxu0 %v607
    %1332 = vmatpush.bf16.msra.mxu0 %v606
    %1333 = vmatpush.bf16.msra.mxu0 %v605
    %1334 = vmatpush.bf16.msra.mxu0 %v604
    %1335 = vmatpush.bf16.msra.mxu0 %v603
    %1336 = vmatpush.bf16.msra.mxu0 %v602
    %1337 = vmatpush.bf16.msra.mxu0 %v601
    %1338 = vmatmul.bf16.gmra.mxu0 %v1010
    %v1339 = vpop.f32.mrf.mxu0
    %v1340 = vadd.f32 %v1211, %v1339
    %v1341 = vpop.f32.mrf.mxu0
    %v1342 = vadd.f32 %v1213, %v1341
    %1343 = vmatmul.bf16.gmra.mxu0 %v1014
    %v1344 = vpop.f32.mrf.mxu0
    %v1345 = vadd.f32 %v1216, %v1344
    %v1346 = vpop.f32.mrf.mxu0
    %v1347 = vadd.f32 %v1218, %v1346
    %1348 = vmatmul.bf16.gmra.mxu0 %v1018
    %v1349 = vpop.f32.mrf.mxu0
    %v1350 = vadd.f32 %v1221, %v1349
    %v1351 = vpop.f32.mrf.mxu0
    %v1352 = vadd.f32 %v1223, %v1351
    %1353 = vmatmul.bf16.gmra.mxu0 %v1022
    %v1354 = vpop.f32.mrf.mxu0
    %v1355 = vadd.f32 %v1226, %v1354
    %v1356 = vpop.f32.mrf.mxu0
    %v1357 = vadd.f32 %v1228, %v1356
    %1358 = vmatmul.bf16.gmra.mxu0 %v1026
    %v1359 = vpop.f32.mrf.mxu0
    %v1360 = vadd.f32 %v1231, %v1359
    %v1361 = vpop.f32.mrf.mxu0
    %v1362 = vadd.f32 %v1233, %v1361
    %1363 = vmatmul.bf16.gmra.mxu0 %v1030
    %v1364 = vpop.f32.mrf.mxu0
    %v1365 = vadd.f32 %v1236, %v1364
    %v1366 = vpop.f32.mrf.mxu0
    %v1367 = vadd.f32 %v1238, %v1366
    %1368 = vmatmul.bf16.gmra.mxu0 %v1034
    %v1369 = vpop.f32.mrf.mxu0
    %v1370 = vadd.f32 %v1241, %v1369
    %v1371 = vpop.f32.mrf.mxu0
    %v1372 = vadd.f32 %v1243, %v1371
    %1373 = vmatmul.bf16.gmra.mxu0 %v1038
    %v1374 = vpop.f32.mrf.mxu0
    %v1375 = vadd.f32 %v1246, %v1374
    %v1376 = vpop.f32.mrf.mxu0
    %v1377 = vadd.f32 %v1248, %v1376
    %1378 = vmatmul.bf16.gmra.mxu0 %v1042
    %v1379 = vpop.f32.mrf.mxu0
    %v1380 = vadd.f32 %v1251, %v1379
    %v1381 = vpop.f32.mrf.mxu0
    %v1382 = vadd.f32 %v1253, %v1381
    %1383 = vmatmul.bf16.gmra.mxu0 %v1046
    %v1384 = vpop.f32.mrf.mxu0
    %v1385 = vadd.f32 %v1256, %v1384
    %v1386 = vpop.f32.mrf.mxu0
    %v1387 = vadd.f32 %v1258, %v1386
    %1388 = vmatmul.bf16.gmra.mxu0 %v1050
    %v1389 = vpop.f32.mrf.mxu0
    %v1390 = vadd.f32 %v1261, %v1389
    %v1391 = vpop.f32.mrf.mxu0
    %v1392 = vadd.f32 %v1263, %v1391
    %1393 = vmatmul.bf16.gmra.mxu0 %v1054
    %v1394 = vpop.f32.mrf.mxu0
    %v1395 = vadd.f32 %v1266, %v1394
    %v1396 = vpop.f32.mrf.mxu0
    %v1397 = vadd.f32 %v1268, %v1396
    %1398 = vmatmul.bf16.gmra.mxu0 %v1058
    %v1399 = vpop.f32.mrf.mxu0
    %v1400 = vadd.f32 %v1271, %v1399
    %v1401 = vpop.f32.mrf.mxu0
    %v1402 = vadd.f32 %v1273, %v1401
    %1403 = vmatmul.bf16.gmra.mxu0 %v1062
    %v1404 = vpop.f32.mrf.mxu0
    %v1405 = vadd.f32 %v1276, %v1404
    %v1406 = vpop.f32.mrf.mxu0
    %v1407 = vadd.f32 %v1278, %v1406
    %1408 = vmatmul.bf16.gmra.mxu0 %v1066
    %v1409 = vpop.f32.mrf.mxu0
    %v1410 = vadd.f32 %v1281, %v1409
    %v1411 = vpop.f32.mrf.mxu0
    %v1412 = vadd.f32 %v1283, %v1411
    %1413 = vmatmul.bf16.gmra.mxu0 %v1070
    %v1414 = vpop.f32.mrf.mxu0
    %v1415 = vadd.f32 %v1286, %v1414
    %v1416 = vpop.f32.mrf.mxu0
    %v1417 = vadd.f32 %v1288, %v1416
    %1418 = vmatmul.bf16.gmra.mxu0 %v1074
    %v1419 = vpop.f32.mrf.mxu0
    %v1420 = vadd.f32 %v1291, %v1419
    %v1421 = vpop.f32.mrf.mxu0
    %v1422 = vadd.f32 %v1293, %v1421
    %1423 = vmatmul.bf16.gmra.mxu0 %v1078
    %v1424 = vpop.f32.mrf.mxu0
    %v1425 = vadd.f32 %v1296, %v1424
    %v1426 = vpop.f32.mrf.mxu0
    %v1427 = vadd.f32 %v1298, %v1426
    %1428 = vmatmul.bf16.gmra.mxu0 %v1082
    %v1429 = vpop.f32.mrf.mxu0
    %v1430 = vadd.f32 %v1301, %v1429
    %v1431 = vpop.f32.mrf.mxu0
    %v1432 = vadd.f32 %v1303, %v1431
    %1433 = vmatmul.bf16.gmra.mxu0 %v1086
    %v1434 = vpop.f32.mrf.mxu0
    %v1435 = vadd.f32 %v1306, %v1434
    %v1436 = vpop.f32.mrf.mxu0
    %v1437 = vadd.f32 %v1308, %v1436
    %1438 = vmatmul.bf16.gmra.mxu0 %v1090
    %v1439 = vpop.f32.mrf.mxu0
    %v1440 = vadd.f32 %v1311, %v1439
    %v1441 = vpop.f32.mrf.mxu0
    %v1442 = vadd.f32 %v1313, %v1441
    %1443 = vmatmul.bf16.gmra.mxu0 %v1094
    %v1444 = vpop.f32.mrf.mxu0
    %v1445 = vadd.f32 %v1316, %v1444
    %v1446 = vpop.f32.mrf.mxu0
    %v1447 = vadd.f32 %v1318, %v1446
    %1448 = vmatmul.bf16.gmra.mxu0 %v1098
    %v1449 = vpop.f32.mrf.mxu0
    %v1450 = vadd.f32 %v1321, %v1449
    %v1451 = vpop.f32.mrf.mxu0
    %v1452 = vadd.f32 %v1323, %v1451
    %1453 = vmatmul.bf16.gmra.mxu0 %v1102
    %v1454 = vpop.f32.mrf.mxu0
    %v1455 = vadd.f32 %v1326, %v1454
    %v1456 = vpop.f32.mrf.mxu0
    %v1457 = vadd.f32 %v1328, %v1456
    %1458 = vdwg.mxu0
    %1459 = vmatpush.bf16.msra.mxu0 %v616
    %1460 = vmatpush.bf16.msra.mxu0 %v615
    %1461 = vmatpush.bf16.msra.mxu0 %v614
    %1462 = vmatpush.bf16.msra.mxu0 %v613
    %1463 = vmatpush.bf16.msra.mxu0 %v612
    %1464 = vmatpush.bf16.msra.mxu0 %v611
    %1465 = vmatpush.bf16.msra.mxu0 %v610
    %1466 = vmatpush.bf16.msra.mxu0 %v609
    %1467 = vmatmul.bf16.gmra.mxu0 %v1011
    %v1468 = vpop.f32.mrf.mxu0
    %v1469 = vadd.f32 %v1340, %v1468
    %v1470 = vpop.f32.mrf.mxu0
    %v1471 = vadd.f32 %v1342, %v1470
    %1472 = vmatmul.bf16.gmra.mxu0 %v1015
    %v1473 = vpop.f32.mrf.mxu0
    %v1474 = vadd.f32 %v1345, %v1473
    %v1475 = vpop.f32.mrf.mxu0
    %v1476 = vadd.f32 %v1347, %v1475
    %1477 = vmatmul.bf16.gmra.mxu0 %v1019
    %v1478 = vpop.f32.mrf.mxu0
    %v1479 = vadd.f32 %v1350, %v1478
    %v1480 = vpop.f32.mrf.mxu0
    %v1481 = vadd.f32 %v1352, %v1480
    %1482 = vmatmul.bf16.gmra.mxu0 %v1023
    %v1483 = vpop.f32.mrf.mxu0
    %v1484 = vadd.f32 %v1355, %v1483
    %v1485 = vpop.f32.mrf.mxu0
    %v1486 = vadd.f32 %v1357, %v1485
    %1487 = vmatmul.bf16.gmra.mxu0 %v1027
    %v1488 = vpop.f32.mrf.mxu0
    %v1489 = vadd.f32 %v1360, %v1488
    %v1490 = vpop.f32.mrf.mxu0
    %v1491 = vadd.f32 %v1362, %v1490
    %1492 = vmatmul.bf16.gmra.mxu0 %v1031
    %v1493 = vpop.f32.mrf.mxu0
    %v1494 = vadd.f32 %v1365, %v1493
    %v1495 = vpop.f32.mrf.mxu0
    %v1496 = vadd.f32 %v1367, %v1495
    %1497 = vmatmul.bf16.gmra.mxu0 %v1035
    %v1498 = vpop.f32.mrf.mxu0
    %v1499 = vadd.f32 %v1370, %v1498
    %v1500 = vpop.f32.mrf.mxu0
    %v1501 = vadd.f32 %v1372, %v1500
    %1502 = vmatmul.bf16.gmra.mxu0 %v1039
    %v1503 = vpop.f32.mrf.mxu0
    %v1504 = vadd.f32 %v1375, %v1503
    %v1505 = vpop.f32.mrf.mxu0
    %v1506 = vadd.f32 %v1377, %v1505
    %1507 = vmatmul.bf16.gmra.mxu0 %v1043
    %v1508 = vpop.f32.mrf.mxu0
    %v1509 = vadd.f32 %v1380, %v1508
    %v1510 = vpop.f32.mrf.mxu0
    %v1511 = vadd.f32 %v1382, %v1510
    %1512 = vmatmul.bf16.gmra.mxu0 %v1047
    %v1513 = vpop.f32.mrf.mxu0
    %v1514 = vadd.f32 %v1385, %v1513
    %v1515 = vpop.f32.mrf.mxu0
    %v1516 = vadd.f32 %v1387, %v1515
    %1517 = vmatmul.bf16.gmra.mxu0 %v1051
    %v1518 = vpop.f32.mrf.mxu0
    %v1519 = vadd.f32 %v1390, %v1518
    %v1520 = vpop.f32.mrf.mxu0
    %v1521 = vadd.f32 %v1392, %v1520
    %1522 = vmatmul.bf16.gmra.mxu0 %v1055
    %v1523 = vpop.f32.mrf.mxu0
    %v1524 = vadd.f32 %v1395, %v1523
    %v1525 = vpop.f32.mrf.mxu0
    %v1526 = vadd.f32 %v1397, %v1525
    %1527 = vmatmul.bf16.gmra.mxu0 %v1059
    %v1528 = vpop.f32.mrf.mxu0
    %v1529 = vadd.f32 %v1400, %v1528
    %v1530 = vpop.f32.mrf.mxu0
    %v1531 = vadd.f32 %v1402, %v1530
    %1532 = vmatmul.bf16.gmra.mxu0 %v1063
    %v1533 = vpop.f32.mrf.mxu0
    %v1534 = vadd.f32 %v1405, %v1533
    %v1535 = vpop.f32.mrf.mxu0
    %v1536 = vadd.f32 %v1407, %v1535
    %1537 = vmatmul.bf16.gmra.mxu0 %v1067
    %v1538 = vpop.f32.mrf.mxu0
    %v1539 = vadd.f32 %v1410, %v1538
    %v1540 = vpop.f32.mrf.mxu0
    %v1541 = vadd.f32 %v1412, %v1540
    %1542 = vmatmul.bf16.gmra.mxu0 %v1071
    %v1543 = vpop.f32.mrf.mxu0
    %v1544 = vadd.f32 %v1415, %v1543
    %v1545 = vpop.f32.mrf.mxu0
    %v1546 = vadd.f32 %v1417, %v1545
    %1547 = vmatmul.bf16.gmra.mxu0 %v1075
    %v1548 = vpop.f32.mrf.mxu0
    %v1549 = vadd.f32 %v1420, %v1548
    %v1550 = vpop.f32.mrf.mxu0
    %v1551 = vadd.f32 %v1422, %v1550
    %1552 = vmatmul.bf16.gmra.mxu0 %v1079
    %v1553 = vpop.f32.mrf.mxu0
    %v1554 = vadd.f32 %v1425, %v1553
    %v1555 = vpop.f32.mrf.mxu0
    %v1556 = vadd.f32 %v1427, %v1555
    %1557 = vmatmul.bf16.gmra.mxu0 %v1083
    %v1558 = vpop.f32.mrf.mxu0
    %v1559 = vadd.f32 %v1430, %v1558
    %v1560 = vpop.f32.mrf.mxu0
    %v1561 = vadd.f32 %v1432, %v1560
    %1562 = vmatmul.bf16.gmra.mxu0 %v1087
    %v1563 = vpop.f32.mrf.mxu0
    %v1564 = vadd.f32 %v1435, %v1563
    %v1565 = vpop.f32.mrf.mxu0
    %v1566 = vadd.f32 %v1437, %v1565
    %1567 = vmatmul.bf16.gmra.mxu0 %v1091
    %v1568 = vpop.f32.mrf.mxu0
    %v1569 = vadd.f32 %v1440, %v1568
    %v1570 = vpop.f32.mrf.mxu0
    %v1571 = vadd.f32 %v1442, %v1570
    %1572 = vmatmul.bf16.gmra.mxu0 %v1095
    %v1573 = vpop.f32.mrf.mxu0
    %v1574 = vadd.f32 %v1445, %v1573
    %v1575 = vpop.f32.mrf.mxu0
    %v1576 = vadd.f32 %v1447, %v1575
    %1577 = vmatmul.bf16.gmra.mxu0 %v1099
    %v1578 = vpop.f32.mrf.mxu0
    %v1579 = vadd.f32 %v1450, %v1578
    %v1580 = vpop.f32.mrf.mxu0
    %v1581 = vadd.f32 %v1452, %v1580
    %1582 = vmatmul.bf16.gmra.mxu0 %v1103
    %v1583 = vpop.f32.mrf.mxu0
    %v1584 = vadd.f32 %v1455, %v1583
    %v1585 = vpop.f32.mrf.mxu0
    %v1586 = vadd.f32 %v1457, %v1585
    %1587 = vdwg.mxu0
    %1588 = vmatpush.bf16.msra.mxu0 %v624
    %1589 = vmatpush.bf16.msra.mxu0 %v623
    %1590 = vmatpush.bf16.msra.mxu0 %v622
    %1591 = vmatpush.bf16.msra.mxu0 %v621
    %1592 = vmatpush.bf16.msra.mxu0 %v620
    %1593 = vmatpush.bf16.msra.mxu0 %v619
    %1594 = vmatpush.bf16.msra.mxu0 %v618
    %1595 = vmatpush.bf16.msra.mxu0 %v617
    %1596 = vmatmul.bf16.gmra.mxu0 %v1012
    %v1597 = vpop.f32.mrf.mxu0
    %v1598 = vadd.f32 %v1469, %v1597
    %v1599 = vpop.f32.mrf.mxu0
    %v1600 = vadd.f32 %v1471, %v1599
    %1601 = vmatmul.bf16.gmra.mxu0 %v1016
    %v1602 = vpop.f32.mrf.mxu0
    %v1603 = vadd.f32 %v1474, %v1602
    %v1604 = vpop.f32.mrf.mxu0
    %v1605 = vadd.f32 %v1476, %v1604
    %1606 = vmatmul.bf16.gmra.mxu0 %v1020
    %v1607 = vpop.f32.mrf.mxu0
    %v1608 = vadd.f32 %v1479, %v1607
    %v1609 = vpop.f32.mrf.mxu0
    %v1610 = vadd.f32 %v1481, %v1609
    %1611 = vmatmul.bf16.gmra.mxu0 %v1024
    %v1612 = vpop.f32.mrf.mxu0
    %v1613 = vadd.f32 %v1484, %v1612
    %v1614 = vpop.f32.mrf.mxu0
    %v1615 = vadd.f32 %v1486, %v1614
    %1616 = vmatmul.bf16.gmra.mxu0 %v1028
    %v1617 = vpop.f32.mrf.mxu0
    %v1618 = vadd.f32 %v1489, %v1617
    %v1619 = vpop.f32.mrf.mxu0
    %v1620 = vadd.f32 %v1491, %v1619
    %1621 = vmatmul.bf16.gmra.mxu0 %v1032
    %v1622 = vpop.f32.mrf.mxu0
    %v1623 = vadd.f32 %v1494, %v1622
    %v1624 = vpop.f32.mrf.mxu0
    %v1625 = vadd.f32 %v1496, %v1624
    %1626 = vmatmul.bf16.gmra.mxu0 %v1036
    %v1627 = vpop.f32.mrf.mxu0
    %v1628 = vadd.f32 %v1499, %v1627
    %v1629 = vpop.f32.mrf.mxu0
    %v1630 = vadd.f32 %v1501, %v1629
    %1631 = vmatmul.bf16.gmra.mxu0 %v1040
    %v1632 = vpop.f32.mrf.mxu0
    %v1633 = vadd.f32 %v1504, %v1632
    %v1634 = vpop.f32.mrf.mxu0
    %v1635 = vadd.f32 %v1506, %v1634
    %1636 = vmatmul.bf16.gmra.mxu0 %v1044
    %v1637 = vpop.f32.mrf.mxu0
    %v1638 = vadd.f32 %v1509, %v1637
    %v1639 = vpop.f32.mrf.mxu0
    %v1640 = vadd.f32 %v1511, %v1639
    %1641 = vmatmul.bf16.gmra.mxu0 %v1048
    %v1642 = vpop.f32.mrf.mxu0
    %v1643 = vadd.f32 %v1514, %v1642
    %v1644 = vpop.f32.mrf.mxu0
    %v1645 = vadd.f32 %v1516, %v1644
    %1646 = vmatmul.bf16.gmra.mxu0 %v1052
    %v1647 = vpop.f32.mrf.mxu0
    %v1648 = vadd.f32 %v1519, %v1647
    %v1649 = vpop.f32.mrf.mxu0
    %v1650 = vadd.f32 %v1521, %v1649
    %1651 = vmatmul.bf16.gmra.mxu0 %v1056
    %v1652 = vpop.f32.mrf.mxu0
    %v1653 = vadd.f32 %v1524, %v1652
    %v1654 = vpop.f32.mrf.mxu0
    %v1655 = vadd.f32 %v1526, %v1654
    %1656 = vmatmul.bf16.gmra.mxu0 %v1060
    %v1657 = vpop.f32.mrf.mxu0
    %v1658 = vadd.f32 %v1529, %v1657
    %v1659 = vpop.f32.mrf.mxu0
    %v1660 = vadd.f32 %v1531, %v1659
    %1661 = vmatmul.bf16.gmra.mxu0 %v1064
    %v1662 = vpop.f32.mrf.mxu0
    %v1663 = vadd.f32 %v1534, %v1662
    %v1664 = vpop.f32.mrf.mxu0
    %v1665 = vadd.f32 %v1536, %v1664
    %1666 = vmatmul.bf16.gmra.mxu0 %v1068
    %v1667 = vpop.f32.mrf.mxu0
    %v1668 = vadd.f32 %v1539, %v1667
    %v1669 = vpop.f32.mrf.mxu0
    %v1670 = vadd.f32 %v1541, %v1669
    %1671 = vmatmul.bf16.gmra.mxu0 %v1072
    %v1672 = vpop.f32.mrf.mxu0
    %v1673 = vadd.f32 %v1544, %v1672
    %v1674 = vpop.f32.mrf.mxu0
    %v1675 = vadd.f32 %v1546, %v1674
    %1676 = vmatmul.bf16.gmra.mxu0 %v1076
    %v1677 = vpop.f32.mrf.mxu0
    %v1678 = vadd.f32 %v1549, %v1677
    %v1679 = vpop.f32.mrf.mxu0
    %v1680 = vadd.f32 %v1551, %v1679
    %1681 = vmatmul.bf16.gmra.mxu0 %v1080
    %v1682 = vpop.f32.mrf.mxu0
    %v1683 = vadd.f32 %v1554, %v1682
    %v1684 = vpop.f32.mrf.mxu0
    %v1685 = vadd.f32 %v1556, %v1684
    %1686 = vmatmul.bf16.gmra.mxu0 %v1084
    %v1687 = vpop.f32.mrf.mxu0
    %v1688 = vadd.f32 %v1559, %v1687
    %v1689 = vpop.f32.mrf.mxu0
    %v1690 = vadd.f32 %v1561, %v1689
    %1691 = vmatmul.bf16.gmra.mxu0 %v1088
    %v1692 = vpop.f32.mrf.mxu0
    %v1693 = vadd.f32 %v1564, %v1692
    %v1694 = vpop.f32.mrf.mxu0
    %v1695 = vadd.f32 %v1566, %v1694
    %1696 = vmatmul.bf16.gmra.mxu0 %v1092
    %v1697 = vpop.f32.mrf.mxu0
    %v1698 = vadd.f32 %v1569, %v1697
    %v1699 = vpop.f32.mrf.mxu0
    %v1700 = vadd.f32 %v1571, %v1699
    %1701 = vmatmul.bf16.gmra.mxu0 %v1096
    %v1702 = vpop.f32.mrf.mxu0
    %v1703 = vadd.f32 %v1574, %v1702
    %v1704 = vpop.f32.mrf.mxu0
    %v1705 = vadd.f32 %v1576, %v1704
    %1706 = vmatmul.bf16.gmra.mxu0 %v1100
    %v1707 = vpop.f32.mrf.mxu0
    %v1708 = vadd.f32 %v1579, %v1707
    %v1709 = vpop.f32.mrf.mxu0
    %v1710 = vadd.f32 %v1581, %v1709
    %1711 = vmatmul.bf16.gmra.mxu0 %v1104
    %v1712 = vpop.f32.mrf.mxu0
    %v1713 = vadd.f32 %v1584, %v1712
    %v1714 = vpop.f32.mrf.mxu0
    %v1715 = vadd.f32 %v1586, %v1714
    %1716 = vdwg.mxu0
    %v1717 = vmax.f32 %v1598, 0.0
    %v1718 = vmax.f32 %v1600, 0.0
    %v1719 = vmax.f32 %v1603, 0.0
    %v1720 = vmax.f32 %v1605, 0.0
    %v1721 = vmax.f32 %v1608, 0.0
    %v1722 = vmax.f32 %v1610, 0.0
    %v1723 = vmax.f32 %v1613, 0.0
    %v1724 = vmax.f32 %v1615, 0.0
    %v1725 = vmax.f32 %v1618, 0.0
    %v1726 = vmax.f32 %v1620, 0.0
    %v1727 = vmax.f32 %v1623, 0.0
    %v1728 = vmax.f32 %v1625, 0.0
    %v1729 = vmax.f32 %v1628, 0.0
    %v1730 = vmax.f32 %v1630, 0.0
    %v1731 = vmax.f32 %v1633, 0.0
    %v1732 = vmax.f32 %v1635, 0.0
    %v1733 = vmax.f32 %v1638, 0.0
    %v1734 = vmax.f32 %v1640, 0.0
    %v1735 = vmax.f32 %v1643, 0.0
    %v1736 = vmax.f32 %v1645, 0.0
    %v1737 = vmax.f32 %v1648, 0.0
    %v1738 = vmax.f32 %v1650, 0.0
    %v1739 = vmax.f32 %v1653, 0.0
    %v1740 = vmax.f32 %v1655, 0.0
    %v1741 = vmax.f32 %v1658, 0.0
    %v1742 = vmax.f32 %v1660, 0.0
    %v1743 = vmax.f32 %v1663, 0.0
    %v1744 = vmax.f32 %v1665, 0.0
    %v1745 = vmax.f32 %v1668, 0.0
    %v1746 = vmax.f32 %v1670, 0.0
    %v1747 = vmax.f32 %v1673, 0.0
    %v1748 = vmax.f32 %v1675, 0.0
    %v1749 = vmax.f32 %v1678, 0.0
    %v1750 = vmax.f32 %v1680, 0.0
    %v1751 = vmax.f32 %v1683, 0.0
    %v1752 = vmax.f32 %v1685, 0.0
    %v1753 = vmax.f32 %v1688, 0.0
    %v1754 = vmax.f32 %v1690, 0.0
    %v1755 = vmax.f32 %v1693, 0.0
    %v1756 = vmax.f32 %v1695, 0.0
    %v1757 = vmax.f32 %v1698, 0.0
    %v1758 = vmax.f32 %v1700, 0.0
    %v1759 = vmax.f32 %v1703, 0.0
    %v1760 = vmax.f32 %v1705, 0.0
    %v1761 = vmax.f32 %v1708, 0.0
    %v1762 = vmax.f32 %v1710, 0.0
    %v1763 = vmax.f32 %v1713, 0.0
    %v1764 = vmax.f32 %v1715, 0.0
    %v1765 = vpack.c.bf16 %v1718, %v1717
    %v1766 = vpack.c.bf16 %v1720, %v1719
    %v1767 = vpack.c.bf16 %v1722, %v1721
    %v1768 = vpack.c.bf16 %v1724, %v1723
    %v1769 = vpack.c.bf16 %v1726, %v1725
    %v1770 = vpack.c.bf16 %v1728, %v1727
    %v1771 = vpack.c.bf16 %v1730, %v1729
    %v1772 = vpack.c.bf16 %v1732, %v1731
    %v1773 = vpack.c.bf16 %v1734, %v1733
    %v1774 = vpack.c.bf16 %v1736, %v1735
    %v1775 = vpack.c.bf16 %v1738, %v1737
    %v1776 = vpack.c.bf16 %v1740, %v1739
    %v1777 = vpack.c.bf16 %v1742, %v1741
    %v1778 = vpack.c.bf16 %v1744, %v1743
    %v1779 = vpack.c.bf16 %v1746, %v1745
    %v1780 = vpack.c.bf16 %v1748, %v1747
    %v1781 = vpack.c.bf16 %v1750, %v1749
    %v1782 = vpack.c.bf16 %v1752, %v1751
    %v1783 = vpack.c.bf16 %v1754, %v1753
    %v1784 = vpack.c.bf16 %v1756, %v1755
    %v1785 = vpack.c.bf16 %v1758, %v1757
    %v1786 = vpack.c.bf16 %v1760, %v1759
    %v1787 = vpack.c.bf16 %v1762, %v1761
    %v1788 = vpack.c.bf16 %v1764, %v1763
    %v1789 = vld [vmem:[%s3] sm:$0x7]
    %1791 = vst [vmem:[#allocation1] ss:$9 sm:$0xff] %v1789
    %v1792 = vld [vmem:[#allocation1] sm:$0xff]
    %v1793 = vld [vmem:[#allocation1 + $0x9] sm:$0xff]
    %v1794 = vld [vmem:[#allocation1 + $0x12] sm:$0xff]
    %1798 = vmatpush.bf16.msra.mxu0 %v1772
    %1799 = vmatpush.bf16.msra.mxu0 %v1771
    %1800 = vmatpush.bf16.msra.mxu0 %v1770
    %1801 = vmatpush.bf16.msra.mxu0 %v1769
    %1802 = vmatpush.bf16.msra.mxu0 %v1768
    %1803 = vmatpush.bf16.msra.mxu0 %v1767
    %1804 = vmatpush.bf16.msra.mxu0 %v1766
    %1805 = vmatpush.bf16.msra.mxu0 %v1765
    %1806 = vmatmul.bf16.gmra.mxu0 %v1792
    %v1807 = vpop.f32.mrf.mxu0
    %v1808 = vadd.f32 0.0, %v1807
    %v1809 = vpop.f32.mrf.mxu0
    %1810 = vdwg.mxu0
    %1811 = vmatpush.bf16.msra.mxu0 %v1780
    %1812 = vmatpush.bf16.msra.mxu0 %v1779
    %1813 = vmatpush.bf16.msra.mxu0 %v1778
    %1814 = vmatpush.bf16.msra.mxu0 %v1777
    %1815 = vmatpush.bf16.msra.mxu0 %v1776
    %1816 = vmatpush.bf16.msra.mxu0 %v1775
    %1817 = vmatpush.bf16.msra.mxu0 %v1774
    %1818 = vmatpush.bf16.msra.mxu0 %v1773
    %1819 = vmatmul.bf16.gmra.mxu0 %v1793
    %v1820 = vpop.f32.mrf.mxu0
    %v1821 = vadd.f32 %v1808, %v1820
    %v1822 = vpop.f32.mrf.mxu0
    %1823 = vdwg.mxu0
    %1824 = vmatpush.bf16.msra.mxu0 %v1788
    %1825 = vmatpush.bf16.msra.mxu0 %v1787
    %1826 = vmatpush.bf16.msra.mxu0 %v1786
    %1827 = vmatpush.bf16.msra.mxu0 %v1785
    %1828 = vmatpush.bf16.msra.mxu0 %v1784
    %1829 = vmatpush.bf16.msra.mxu0 %v1783
    %1830 = vmatpush.bf16.msra.mxu0 %v1782
    %1831 = vmatpush.bf16.msra.mxu0 %v1781
    %1832 = vmatmul.bf16.gmra.mxu0 %v1794
    %v1833 = vpop.f32.mrf.mxu0
    %v1834 = vadd.f32 %v1821, %v1833
    %v1835 = vpop.f32.mrf.mxu0
    %1836 = vdwg.mxu0
    %1837 = vst [vmem:[%s4] sm:$0x1] %v1834
    // Predicated region
    $region22: #{critic_forward.1} parent=1 // pred_check
      _
    $region23: #{critic_forward.1} parent=1 // pred_check_branch
      %1839 = sbr.rel (0) target = $region25
    $region24: #{critic_forward.1} parent=1 // pred_region
      _
    $region25: #{critic_forward.1} parent=1 // pred_fallthru
      _
    // Predicated region
    $region26: #{critic_forward.1} parent=1 // pred_check
      _
    $region27: #{critic_forward.1} parent=1 // pred_check_branch
      %1841 = sbr.rel (0) target = $region29
    $region28: #{critic_forward.1} parent=1 // pred_region
      _
    $region29: #{critic_forward.1} parent=1 // pred_fallthru
      _
    %1842 = vsyncpa [#allocation3], 1

</llo_original>
